<compile_context>
chip_gen: v7x
topology: tpu7x:2x2x1
jax: 0.10.0
libtpu: 0.0.40
codegen_flags: <defaults>
</compile_context>

<pallas_src>
import functools
import math

import jax
import jax.numpy as jnp
from jax import lax
from jax.experimental import pallas as pl
from jax.experimental.pallas import tpu as pltpu

LANE = 128
SUBLANE = 8
INT_MIN = -(1 << 31)


# ---------------------------------------------------------------------------
# In-kernel helpers (traced inside the Pallas kernel bodies).
# ---------------------------------------------------------------------------
def _sortable_key(x):
    """Monotone map float32 -> int32: x1 < x2  <=>  key(x1) < key(x2) (signed)."""
    b = lax.bitcast_convert_type(x, jnp.int32)
    return jnp.where(b < 0, jnp.int32(INT_MIN) - b, b)


def _count(mask):
    """Number of True entries of a bool tile as a (1, 1) float32 (exact < 2^24)."""
    return jnp.sum(mask.astype(jnp.float32), keepdims=True)


def _kth_largest_key(key, valid, k):
    """Exact k-th largest int32 key among `valid` positions, as a (1, 1) int32.

    Fully-unrolled 32-step greedy bit search in offset (unsigned-order) space:
    the largest threshold t with count(key >= t) >= k *is* the k-th largest
    key.  32 serial count reductions, independent of k (the previous argmax
    loop needed 2*k = 128 serial reductions for k = 64).
    """
    kf = jnp.float32(k)
    sign = jnp.int32(INT_MIN)
    v = jnp.zeros((1, 1), jnp.int32)          # threshold bits, offset space
    for i in range(31, -1, -1):
        bit = INT_MIN if i == 31 else (1 << i)
        cand_v = v | jnp.int32(bit)
        cand_t = cand_v ^ sign                # back to signed (score) order
        cnt = _count(valid & (key >= cand_t))
        v = jnp.where(cnt >= kf, cand_v, v)
    return v ^ sign


def _smallest_index_fill(tie, flat_idx, needed, idx_bits):
    """Bool mask of the `needed` smallest flat indices among `tie` positions."""
    t = jnp.zeros((1, 1), jnp.int32)
    for i in range(idx_bits - 1, -1, -1):
        cand = t | jnp.int32(1 << i)
        cnt = _count(tie & (flat_idx <= cand))
        t = jnp.where(cnt <= needed, cand, t)
    return tie & (flat_idx <= t)


def _iota_and_valid(shape, n_valid):
    row = lax.broadcasted_iota(jnp.int32, shape, 0)
    col = lax.broadcasted_iota(jnp.int32, shape, 1)
    flat_idx = row * shape[1] + col
    return flat_idx, flat_idx < n_valid


# ---------------------------------------------------------------------------
# Kernels.
# ---------------------------------------------------------------------------
def _gumbel_topk_train_kernel(logits_ref, gumbel_ref, logistic_ref, out_ref, *,
                              k, n_valid):
    _, valid = _iota_and_valid(logits_ref.shape, n_valid)
    # 1/temperature does not change the top-k ordering -> dropped.
    scores = logits_ref[...] + gumbel_ref[...]
    key = _sortable_key(scores)
    thr = _kth_largest_key(key, valid, k)
    # Gumbel noise makes score ties measure-zero, so `>= thr` selects exactly
    # k positions; the exact tie-fill is only needed on the eval path.
    mask = (valid & (key >= thr)).astype(jnp.float32)
    # Hard 2-class Gumbel-softmax over logits [0, mask]: forward value of
    # class 1 is 1 iff mask + g1 > 0 + g0, i.e. mask > (g0 - g1) ~ Logistic.
    # The 1/tau factors cancel.  (Yes, this re-randomizes the mask on every
    # forward pass — that is exactly what the reference PyTorch module does.)
    out_ref[...] = (mask > logistic_ref[...]).astype(jnp.float32)


def _hard_topk_kernel(logits_ref, out_ref, *, k, n_valid):
    flat_idx, valid = _iota_and_valid(logits_ref.shape, n_valid)
    key = _sortable_key(logits_ref[...])
    thr = _kth_largest_key(key, valid, k)
    gt = valid & (key > thr)
    tie = valid & (key == thr)
    needed = jnp.float32(k) - _count(gt)
    idx_bits = max(1, (n_valid - 1).bit_length())
    sel = gt | _smallest_index_fill(tie, flat_idx, needed, idx_bits)
    out_ref[...] = sel.astype(jnp.float32)


# ---------------------------------------------------------------------------
# Wrapper.
# ---------------------------------------------------------------------------
def _pad_to_tile(flat, n):
    rows = max(1, -(-n // LANE))
    rows = -(-rows // SUBLANE) * SUBLANE      # keep the sublane dim 8-aligned
    pad = rows * LANE - n
    if pad:
        flat = jnp.pad(flat, (0, pad))
    return flat.reshape(rows, LANE)


def gumbel_topk_forward(mask_logits, k, temperature, seed=0, training=True):
    """Forward pass of GumbelTopK.

    `temperature` cancels in the forward value (both in the top-k ordering and
    the hard 2-class argmax), so it is accepted for API parity but unused.
    """
    shape = mask_logits.shape
    n = int(math.prod(shape))
    k = int(k)
    if not 0 < k <= n:
        raise ValueError(f"k={k} must be in (0, {n}]")

    x2d = _pad_to_tile(mask_logits.reshape(-1).astype(jnp.float32), n)
    rows = x2d.shape[0]
    vmem = pl.BlockSpec(memory_space=pltpu.MemorySpace.VMEM)
    out_sds = jax.ShapeDtypeStruct((rows, LANE), jnp.float32)
    # NOTE: single VMEM-resident block, no grid — the working set is a few KiB.
    # If the mask tensor is ever scaled to many MiB, switch to a row-tiled
    # parallel grid with a two-level top-k merge and set
    # pltpu.CompilerParams(vmem_limit_bytes=...).
    # TODO(synk): batch many masks into one pallas_call (or fuse into the
    # surrounding JAX) if this op is dispatched per training step at this size.

    if training:
        # Noise generated host-side with jax.random (the in-kernel TPU PRNG has
        # no interpret-mode lowering).  One Gumbel draw drives the top-k; a
        # single logistic draw replaces the two Gumbel draws of the 2-class
        # hard sample (distributionally identical, ~3x less noise/EUP work).
        kg, kl = jax.random.split(jax.random.PRNGKey(seed))
        u = jax.random.uniform(kg, (rows, LANE), jnp.float32)
        gumbel = -jnp.log(-jnp.log(u + 1e-8) + 1e-8)
        logistic = jax.random.logistic(kl, (rows, LANE), jnp.float32)
        out2d = pl.pallas_call(
            functools.partial(_gumbel_topk_train_kernel, k=k, n_valid=n),
            out_shape=out_sds,
            in_specs=[vmem, vmem, vmem],
            out_specs=vmem,
        )(x2d, gumbel, logistic)
    else:
        out2d = pl.pallas_call(
            functools.partial(_hard_topk_kernel, k=k, n_valid=n),
            out_shape=out_sds,
            in_specs=[vmem],
            out_specs=vmem,
        )(x2d)

    return out2d.reshape(-1)[:n].reshape(shape)


class GumbelTopK:
    """JAX/Pallas port of the PyTorch GumbelTopK module (forward only)."""

    def __init__(self, shape, k, temperature=1.0, key=None):
        self.shape = tuple(shape)
        self.k = int(k)
        self.temperature = float(temperature)
        key = jax.random.PRNGKey(0) if key is None else key
        # nn.init.normal_(mean=0, std=0.1), deterministic in-script
        self.mask_logits = 0.1 * jax.random.normal(key, self.shape,
                                                   dtype=jnp.float32)

    def __call__(self, seed=0, training=True):
        return gumbel_topk_forward(self.mask_logits, self.k, self.temperature,
                                   seed, training)

    def update_temperature(self, new_temperature):
        self.temperature = max(float(new_temperature), 1e-8)


def hard_topk_ref(logits, k):
    """Pure-JAX reference for the eval (hard top-k) path."""
    flat = logits.reshape(-1)
    _, idx = jax.lax.top_k(flat, k)
    mask = jnp.zeros_like(flat).at[idx].set(1.0)
    return mask.reshape(logits.shape)


if __name__ == "__main__":
    shape = (4, 16, 16)   # weight-tensor shape for the sparsity mask
    k = 64
    mod = GumbelTopK(shape, k, temperature=1.0, key=jax.random.PRNGKey(0))

    # Training path: Gumbel-noised top-k + hard 2-class Gumbel-softmax
    # (forward values are exact 0/1).
    train_mask = jax.block_until_ready(mod(seed=0, training=True))
    assert train_mask.shape == shape
    assert train_mask.dtype == jnp.float32
    assert bool(jnp.all((train_mask == 0.0) | (train_mask == 1.0)))

    # Eval path: deterministic hard top-k — must match lax.top_k exactly.
    eval_mask = jax.block_until_ready(mod(seed=0, training=False))
    ref_mask = hard_topk_ref(mod.mask_logits, k)
    assert int(eval_mask.sum()) == k
    assert bool(jnp.array_equal(eval_mask, ref_mask))

    # Tie / padding stress: all-equal logits, n not a multiple of 128.
    tie_logits = jnp.zeros((2, 3, 5), jnp.float32)
    tie_mask = jax.block_until_ready(
        gumbel_topk_forward(tie_logits, 7, 1.0, seed=0, training=False))
    assert int(tie_mask.sum()) == 7
    assert bool(jnp.array_equal(tie_mask, hard_topk_ref(tie_logits, 7)))

    print("KERNEL_OK")
</pallas_src>

<mosaic_0001>
module attributes {stable_mosaic.version = 11 : i64} {
  func.func @_gumbel_topk_train_kernel(%arg0: memref<8x128xf32, #tpu.memory_space<vmem>>, %arg1: memref<8x128xf32, #tpu.memory_space<vmem>>, %arg2: memref<8x128xf32, #tpu.memory_space<vmem>>, %arg3: memref<8x128xf32, #tpu.memory_space<vmem>>) attributes {dimension_semantics = [], scalar_prefetch = 0 : i64, scratch_operands = 0 : i64, tpu.core_type = #tpu.core_type<tc>} {
    %0 = tpu.iota {dimensions = array<i32: 0>} : vector<8x128xi32>
    %1 = tpu.iota {dimensions = array<i32: 1>} : vector<8x128xi32>
    %c128_i32 = arith.constant 128 : i32
    %2 = vector.broadcast %c128_i32 : i32 to vector<8x128xi32>
    %3 = arith.muli %0, %2 : vector<8x128xi32>
    %4 = arith.addi %3, %1 : vector<8x128xi32>
    %c1024_i32 = arith.constant 1024 : i32
    %5 = vector.broadcast %c1024_i32 : i32 to vector<8x128xi32>
    %6 = arith.cmpi slt, %4, %5 : vector<8x128xi32>
    %c0 = arith.constant 0 : index
    %c0_0 = arith.constant 0 : index
    %7 = vector.load %arg0[%c0, %c0_0] : memref<8x128xf32, #tpu.memory_space<vmem>>, vector<8x128xf32>
    %c0_1 = arith.constant 0 : index
    %c0_2 = arith.constant 0 : index
    %8 = vector.load %arg1[%c0_1, %c0_2] : memref<8x128xf32, #tpu.memory_space<vmem>>, vector<8x128xf32>
    %9 = arith.addf %7, %8 : vector<8x128xf32>
    %10 = tpu.bitcast %9 : vector<8x128xf32> -> vector<8x128xi32>
    %c0_i32 = arith.constant 0 : i32
    %11 = vector.broadcast %c0_i32 : i32 to vector<8x128xi32>
    %12 = arith.cmpi slt, %10, %11 : vector<8x128xi32>
    %c-2147483648_i32 = arith.constant -2147483648 : i32
    %13 = vector.broadcast %c-2147483648_i32 : i32 to vector<8x128xi32>
    %14 = arith.subi %13, %10 : vector<8x128xi32>
    %15 = arith.select %12, %14, %10 : vector<8x128xi1>, vector<8x128xi32>
    %c0_i32_3 = arith.constant 0 : i32
    %16 = vector.broadcast %c0_i32_3 : i32 to vector<1x1xi32>
    %c-2147483648_i32_4 = arith.constant -2147483648 : i32
    %17 = vector.broadcast %c-2147483648_i32_4 : i32 to vector<1x1xi32>
    %18 = arith.ori %16, %17 : vector<1x1xi32>
    %c-2147483648_i32_5 = arith.constant -2147483648 : i32
    %19 = vector.broadcast %c-2147483648_i32_5 : i32 to vector<1x1xi32>
    %20 = arith.xori %18, %19 : vector<1x1xi32>
    %21 = vector.broadcast %20 : vector<1x1xi32> to vector<8x128xi32>
    %22 = arith.cmpi sge, %15, %21 : vector<8x128xi32>
    %23 = arith.andi %6, %22 : vector<8x128xi1>
    %24 = arith.extui %23 : vector<8x128xi1> to vector<8x128xi32>
    %25 = arith.sitofp %24 : vector<8x128xi32> to vector<8x128xf32>
    %26 = vector.shape_cast %25 : vector<8x128xf32> to vector<1x8x128xf32>
    %cst = arith.constant dense<0.000000e+00> : vector<1xf32>
    %27 = vector.multi_reduction <add>, %26, %cst [1, 2] : vector<1x8x128xf32> to vector<1xf32>
    %28 = vector.shape_cast %27 : vector<1xf32> to vector<1x1x1xf32>
    %29 = vector.extract %28[0, 0, 0] : f32 from vector<1x1x1xf32>
    %30 = vector.broadcast %29 : f32 to vector<1x1xf32>
    %cst_6 = arith.constant 6.400000e+01 : f32
    %31 = vector.broadcast %cst_6 : f32 to vector<1x1xf32>
    %32 = arith.cmpf oge, %30, %31 : vector<1x1xf32>
    %33 = arith.select %32, %18, %16 : vector<1x1xi1>, vector<1x1xi32>
    %c1073741824_i32 = arith.constant 1073741824 : i32
    %34 = vector.broadcast %c1073741824_i32 : i32 to vector<1x1xi32>
    %35 = arith.ori %33, %34 : vector<1x1xi32>
    %c-2147483648_i32_7 = arith.constant -2147483648 : i32
    %36 = vector.broadcast %c-2147483648_i32_7 : i32 to vector<1x1xi32>
    %37 = arith.xori %35, %36 : vector<1x1xi32>
    %38 = vector.broadcast %37 : vector<1x1xi32> to vector<8x128xi32>
    %39 = arith.cmpi sge, %15, %38 : vector<8x128xi32>
    %40 = arith.andi %6, %39 : vector<8x128xi1>
    %41 = arith.extui %40 : vector<8x128xi1> to vector<8x128xi32>
    %42 = arith.sitofp %41 : vector<8x128xi32> to vector<8x128xf32>
    %43 = vector.shape_cast %42 : vector<8x128xf32> to vector<1x8x128xf32>
    %cst_8 = arith.constant dense<0.000000e+00> : vector<1xf32>
    %44 = vector.multi_reduction <add>, %43, %cst_8 [1, 2] : vector<1x8x128xf32> to vector<1xf32>
    %45 = vector.shape_cast %44 : vector<1xf32> to vector<1x1x1xf32>
    %46 = vector.extract %45[0, 0, 0] : f32 from vector<1x1x1xf32>
    %47 = vector.broadcast %46 : f32 to vector<1x1xf32>
    %cst_9 = arith.constant 6.400000e+01 : f32
    %48 = vector.broadcast %cst_9 : f32 to vector<1x1xf32>
    %49 = arith.cmpf oge, %47, %48 : vector<1x1xf32>
    %50 = arith.select %49, %35, %33 : vector<1x1xi1>, vector<1x1xi32>
    %c536870912_i32 = arith.constant 536870912 : i32
    %51 = vector.broadcast %c536870912_i32 : i32 to vector<1x1xi32>
    %52 = arith.ori %50, %51 : vector<1x1xi32>
    %c-2147483648_i32_10 = arith.constant -2147483648 : i32
    %53 = vector.broadcast %c-2147483648_i32_10 : i32 to vector<1x1xi32>
    %54 = arith.xori %52, %53 : vector<1x1xi32>
    %55 = vector.broadcast %54 : vector<1x1xi32> to vector<8x128xi32>
    %56 = arith.cmpi sge, %15, %55 : vector<8x128xi32>
    %57 = arith.andi %6, %56 : vector<8x128xi1>
    %58 = arith.extui %57 : vector<8x128xi1> to vector<8x128xi32>
    %59 = arith.sitofp %58 : vector<8x128xi32> to vector<8x128xf32>
    %60 = vector.shape_cast %59 : vector<8x128xf32> to vector<1x8x128xf32>
    %cst_11 = arith.constant dense<0.000000e+00> : vector<1xf32>
    %61 = vector.multi_reduction <add>, %60, %cst_11 [1, 2] : vector<1x8x128xf32> to vector<1xf32>
    %62 = vector.shape_cast %61 : vector<1xf32> to vector<1x1x1xf32>
    %63 = vector.extract %62[0, 0, 0] : f32 from vector<1x1x1xf32>
    %64 = vector.broadcast %63 : f32 to vector<1x1xf32>
    %cst_12 = arith.constant 6.400000e+01 : f32
    %65 = vector.broadcast %cst_12 : f32 to vector<1x1xf32>
    %66 = arith.cmpf oge, %64, %65 : vector<1x1xf32>
    %67 = arith.select %66, %52, %50 : vector<1x1xi1>, vector<1x1xi32>
    %c268435456_i32 = arith.constant 268435456 : i32
    %68 = vector.broadcast %c268435456_i32 : i32 to vector<1x1xi32>
    %69 = arith.ori %67, %68 : vector<1x1xi32>
    %c-2147483648_i32_13 = arith.constant -2147483648 : i32
    %70 = vector.broadcast %c-2147483648_i32_13 : i32 to vector<1x1xi32>
    %71 = arith.xori %69, %70 : vector<1x1xi32>
    %72 = vector.broadcast %71 : vector<1x1xi32> to vector<8x128xi32>
    %73 = arith.cmpi sge, %15, %72 : vector<8x128xi32>
    %74 = arith.andi %6, %73 : vector<8x128xi1>
    %75 = arith.extui %74 : vector<8x128xi1> to vector<8x128xi32>
    %76 = arith.sitofp %75 : vector<8x128xi32> to vector<8x128xf32>
    %77 = vector.shape_cast %76 : vector<8x128xf32> to vector<1x8x128xf32>
    %cst_14 = arith.constant dense<0.000000e+00> : vector<1xf32>
    %78 = vector.multi_reduction <add>, %77, %cst_14 [1, 2] : vector<1x8x128xf32> to vector<1xf32>
    %79 = vector.shape_cast %78 : vector<1xf32> to vector<1x1x1xf32>
    %80 = vector.extract %79[0, 0, 0] : f32 from vector<1x1x1xf32>
    %81 = vector.broadcast %80 : f32 to vector<1x1xf32>
    %cst_15 = arith.constant 6.400000e+01 : f32
    %82 = vector.broadcast %cst_15 : f32 to vector<1x1xf32>
    %83 = arith.cmpf oge, %81, %82 : vector<1x1xf32>
    %84 = arith.select %83, %69, %67 : vector<1x1xi1>, vector<1x1xi32>
    %c134217728_i32 = arith.constant 134217728 : i32
    %85 = vector.broadcast %c134217728_i32 : i32 to vector<1x1xi32>
    %86 = arith.ori %84, %85 : vector<1x1xi32>
    %c-2147483648_i32_16 = arith.constant -2147483648 : i32
    %87 = vector.broadcast %c-2147483648_i32_16 : i32 to vector<1x1xi32>
    %88 = arith.xori %86, %87 : vector<1x1xi32>
    %89 = vector.broadcast %88 : vector<1x1xi32> to vector<8x128xi32>
    %90 = arith.cmpi sge, %15, %89 : vector<8x128xi32>
    %91 = arith.andi %6, %90 : vector<8x128xi1>
    %92 = arith.extui %91 : vector<8x128xi1> to vector<8x128xi32>
    %93 = arith.sitofp %92 : vector<8x128xi32> to vector<8x128xf32>
    %94 = vector.shape_cast %93 : vector<8x128xf32> to vector<1x8x128xf32>
    %cst_17 = arith.constant dense<0.000000e+00> : vector<1xf32>
    %95 = vector.multi_reduction <add>, %94, %cst_17 [1, 2] : vector<1x8x128xf32> to vector<1xf32>
    %96 = vector.shape_cast %95 : vector<1xf32> to vector<1x1x1xf32>
    %97 = vector.extract %96[0, 0, 0] : f32 from vector<1x1x1xf32>
    %98 = vector.broadcast %97 : f32 to vector<1x1xf32>
    %cst_18 = arith.constant 6.400000e+01 : f32
    %99 = vector.broadcast %cst_18 : f32 to vector<1x1xf32>
    %100 = arith.cmpf oge, %98, %99 : vector<1x1xf32>
    %101 = arith.select %100, %86, %84 : vector<1x1xi1>, vector<1x1xi32>
    %c67108864_i32 = arith.constant 67108864 : i32
    %102 = vector.broadcast %c67108864_i32 : i32 to vector<1x1xi32>
    %103 = arith.ori %101, %102 : vector<1x1xi32>
    %c-2147483648_i32_19 = arith.constant -2147483648 : i32
    %104 = vector.broadcast %c-2147483648_i32_19 : i32 to vector<1x1xi32>
    %105 = arith.xori %103, %104 : vector<1x1xi32>
    %106 = vector.broadcast %105 : vector<1x1xi32> to vector<8x128xi32>
    %107 = arith.cmpi sge, %15, %106 : vector<8x128xi32>
    %108 = arith.andi %6, %107 : vector<8x128xi1>
    %109 = arith.extui %108 : vector<8x128xi1> to vector<8x128xi32>
    %110 = arith.sitofp %109 : vector<8x128xi32> to vector<8x128xf32>
    %111 = vector.shape_cast %110 : vector<8x128xf32> to vector<1x8x128xf32>
    %cst_20 = arith.constant dense<0.000000e+00> : vector<1xf32>
    %112 = vector.multi_reduction <add>, %111, %cst_20 [1, 2] : vector<1x8x128xf32> to vector<1xf32>
    %113 = vector.shape_cast %112 : vector<1xf32> to vector<1x1x1xf32>
    %114 = vector.extract %113[0, 0, 0] : f32 from vector<1x1x1xf32>
    %115 = vector.broadcast %114 : f32 to vector<1x1xf32>
    %cst_21 = arith.constant 6.400000e+01 : f32
    %116 = vector.broadcast %cst_21 : f32 to vector<1x1xf32>
    %117 = arith.cmpf oge, %115, %116 : vector<1x1xf32>
    %118 = arith.select %117, %103, %101 : vector<1x1xi1>, vector<1x1xi32>
    %c33554432_i32 = arith.constant 33554432 : i32
    %119 = vector.broadcast %c33554432_i32 : i32 to vector<1x1xi32>
    %120 = arith.ori %118, %119 : vector<1x1xi32>
    %c-2147483648_i32_22 = arith.constant -2147483648 : i32
    %121 = vector.broadcast %c-2147483648_i32_22 : i32 to vector<1x1xi32>
    %122 = arith.xori %120, %121 : vector<1x1xi32>
    %123 = vector.broadcast %122 : vector<1x1xi32> to vector<8x128xi32>
    %124 = arith.cmpi sge, %15, %123 : vector<8x128xi32>
    %125 = arith.andi %6, %124 : vector<8x128xi1>
    %126 = arith.extui %125 : vector<8x128xi1> to vector<8x128xi32>
    %127 = arith.sitofp %126 : vector<8x128xi32> to vector<8x128xf32>
    %128 = vector.shape_cast %127 : vector<8x128xf32> to vector<1x8x128xf32>
    %cst_23 = arith.constant dense<0.000000e+00> : vector<1xf32>
    %129 = vector.multi_reduction <add>, %128, %cst_23 [1, 2] : vector<1x8x128xf32> to vector<1xf32>
    %130 = vector.shape_cast %129 : vector<1xf32> to vector<1x1x1xf32>
    %131 = vector.extract %130[0, 0, 0] : f32 from vector<1x1x1xf32>
    %132 = vector.broadcast %131 : f32 to vector<1x1xf32>
    %cst_24 = arith.constant 6.400000e+01 : f32
    %133 = vector.broadcast %cst_24 : f32 to vector<1x1xf32>
    %134 = arith.cmpf oge, %132, %133 : vector<1x1xf32>
    %135 = arith.select %134, %120, %118 : vector<1x1xi1>, vector<1x1xi32>
    %c16777216_i32 = arith.constant 16777216 : i32
    %136 = vector.broadcast %c16777216_i32 : i32 to vector<1x1xi32>
    %137 = arith.ori %135, %136 : vector<1x1xi32>
    %c-2147483648_i32_25 = arith.constant -2147483648 : i32
    %138 = vector.broadcast %c-2147483648_i32_25 : i32 to vector<1x1xi32>
    %139 = arith.xori %137, %138 : vector<1x1xi32>
    %140 = vector.broadcast %139 : vector<1x1xi32> to vector<8x128xi32>
    %141 = arith.cmpi sge, %15, %140 : vector<8x128xi32>
    %142 = arith.andi %6, %141 : vector<8x128xi1>
    %143 = arith.extui %142 : vector<8x128xi1> to vector<8x128xi32>
    %144 = arith.sitofp %143 : vector<8x128xi32> to vector<8x128xf32>
    %145 = vector.shape_cast %144 : vector<8x128xf32> to vector<1x8x128xf32>
    %cst_26 = arith.constant dense<0.000000e+00> : vector<1xf32>
    %146 = vector.multi_reduction <add>, %145, %cst_26 [1, 2] : vector<1x8x128xf32> to vector<1xf32>
    %147 = vector.shape_cast %146 : vector<1xf32> to vector<1x1x1xf32>
    %148 = vector.extract %147[0, 0, 0] : f32 from vector<1x1x1xf32>
    %149 = vector.broadcast %148 : f32 to vector<1x1xf32>
    %cst_27 = arith.constant 6.400000e+01 : f32
    %150 = vector.broadcast %cst_27 : f32 to vector<1x1xf32>
    %151 = arith.cmpf oge, %149, %150 : vector<1x1xf32>
    %152 = arith.select %151, %137, %135 : vector<1x1xi1>, vector<1x1xi32>
    %c8388608_i32 = arith.constant 8388608 : i32
    %153 = vector.broadcast %c8388608_i32 : i32 to vector<1x1xi32>
    %154 = arith.ori %152, %153 : vector<1x1xi32>
    %c-2147483648_i32_28 = arith.constant -2147483648 : i32
    %155 = vector.broadcast %c-2147483648_i32_28 : i32 to vector<1x1xi32>
    %156 = arith.xori %154, %155 : vector<1x1xi32>
    %157 = vector.broadcast %156 : vector<1x1xi32> to vector<8x128xi32>
    %158 = arith.cmpi sge, %15, %157 : vector<8x128xi32>
    %159 = arith.andi %6, %158 : vector<8x128xi1>
    %160 = arith.extui %159 : vector<8x128xi1> to vector<8x128xi32>
    %161 = arith.sitofp %160 : vector<8x128xi32> to vector<8x128xf32>
    %162 = vector.shape_cast %161 : vector<8x128xf32> to vector<1x8x128xf32>
    %cst_29 = arith.constant dense<0.000000e+00> : vector<1xf32>
    %163 = vector.multi_reduction <add>, %162, %cst_29 [1, 2] : vector<1x8x128xf32> to vector<1xf32>
    %164 = vector.shape_cast %163 : vector<1xf32> to vector<1x1x1xf32>
    %165 = vector.extract %164[0, 0, 0] : f32 from vector<1x1x1xf32>
    %166 = vector.broadcast %165 : f32 to vector<1x1xf32>
    %cst_30 = arith.constant 6.400000e+01 : f32
    %167 = vector.broadcast %cst_30 : f32 to vector<1x1xf32>
    %168 = arith.cmpf oge, %166, %167 : vector<1x1xf32>
    %169 = arith.select %168, %154, %152 : vector<1x1xi1>, vector<1x1xi32>
    %c4194304_i32 = arith.constant 4194304 : i32
    %170 = vector.broadcast %c4194304_i32 : i32 to vector<1x1xi32>
    %171 = arith.ori %169, %170 : vector<1x1xi32>
    %c-2147483648_i32_31 = arith.constant -2147483648 : i32
    %172 = vector.broadcast %c-2147483648_i32_31 : i32 to vector<1x1xi32>
    %173 = arith.xori %171, %172 : vector<1x1xi32>
    %174 = vector.broadcast %173 : vector<1x1xi32> to vector<8x128xi32>
    %175 = arith.cmpi sge, %15, %174 : vector<8x128xi32>
    %176 = arith.andi %6, %175 : vector<8x128xi1>
    %177 = arith.extui %176 : vector<8x128xi1> to vector<8x128xi32>
    %178 = arith.sitofp %177 : vector<8x128xi32> to vector<8x128xf32>
    %179 = vector.shape_cast %178 : vector<8x128xf32> to vector<1x8x128xf32>
    %cst_32 = arith.constant dense<0.000000e+00> : vector<1xf32>
    %180 = vector.multi_reduction <add>, %179, %cst_32 [1, 2] : vector<1x8x128xf32> to vector<1xf32>
    %181 = vector.shape_cast %180 : vector<1xf32> to vector<1x1x1xf32>
    %182 = vector.extract %181[0, 0, 0] : f32 from vector<1x1x1xf32>
    %183 = vector.broadcast %182 : f32 to vector<1x1xf32>
    %cst_33 = arith.constant 6.400000e+01 : f32
    %184 = vector.broadcast %cst_33 : f32 to vector<1x1xf32>
    %185 = arith.cmpf oge, %183, %184 : vector<1x1xf32>
    %186 = arith.select %185, %171, %169 : vector<1x1xi1>, vector<1x1xi32>
    %c2097152_i32 = arith.constant 2097152 : i32
    %187 = vector.broadcast %c2097152_i32 : i32 to vector<1x1xi32>
    %188 = arith.ori %186, %187 : vector<1x1xi32>
    %c-2147483648_i32_34 = arith.constant -2147483648 : i32
    %189 = vector.broadcast %c-2147483648_i32_34 : i32 to vector<1x1xi32>
    %190 = arith.xori %188, %189 : vector<1x1xi32>
    %191 = vector.broadcast %190 : vector<1x1xi32> to vector<8x128xi32>
    %192 = arith.cmpi sge, %15, %191 : vector<8x128xi32>
    %193 = arith.andi %6, %192 : vector<8x128xi1>
    %194 = arith.extui %193 : vector<8x128xi1> to vector<8x128xi32>
    %195 = arith.sitofp %194 : vector<8x128xi32> to vector<8x128xf32>
    %196 = vector.shape_cast %195 : vector<8x128xf32> to vector<1x8x128xf32>
    %cst_35 = arith.constant dense<0.000000e+00> : vector<1xf32>
    %197 = vector.multi_reduction <add>, %196, %cst_35 [1, 2] : vector<1x8x128xf32> to vector<1xf32>
    %198 = vector.shape_cast %197 : vector<1xf32> to vector<1x1x1xf32>
    %199 = vector.extract %198[0, 0, 0] : f32 from vector<1x1x1xf32>
    %200 = vector.broadcast %199 : f32 to vector<1x1xf32>
    %cst_36 = arith.constant 6.400000e+01 : f32
    %201 = vector.broadcast %cst_36 : f32 to vector<1x1xf32>
    %202 = arith.cmpf oge, %200, %201 : vector<1x1xf32>
    %203 = arith.select %202, %188, %186 : vector<1x1xi1>, vector<1x1xi32>
    %c1048576_i32 = arith.constant 1048576 : i32
    %204 = vector.broadcast %c1048576_i32 : i32 to vector<1x1xi32>
    %205 = arith.ori %203, %204 : vector<1x1xi32>
    %c-2147483648_i32_37 = arith.constant -2147483648 : i32
    %206 = vector.broadcast %c-2147483648_i32_37 : i32 to vector<1x1xi32>
    %207 = arith.xori %205, %206 : vector<1x1xi32>
    %208 = vector.broadcast %207 : vector<1x1xi32> to vector<8x128xi32>
    %209 = arith.cmpi sge, %15, %208 : vector<8x128xi32>
    %210 = arith.andi %6, %209 : vector<8x128xi1>
    %211 = arith.extui %210 : vector<8x128xi1> to vector<8x128xi32>
    %212 = arith.sitofp %211 : vector<8x128xi32> to vector<8x128xf32>
    %213 = vector.shape_cast %212 : vector<8x128xf32> to vector<1x8x128xf32>
    %cst_38 = arith.constant dense<0.000000e+00> : vector<1xf32>
    %214 = vector.multi_reduction <add>, %213, %cst_38 [1, 2] : vector<1x8x128xf32> to vector<1xf32>
    %215 = vector.shape_cast %214 : vector<1xf32> to vector<1x1x1xf32>
    %216 = vector.extract %215[0, 0, 0] : f32 from vector<1x1x1xf32>
    %217 = vector.broadcast %216 : f32 to vector<1x1xf32>
    %cst_39 = arith.constant 6.400000e+01 : f32
    %218 = vector.broadcast %cst_39 : f32 to vector<1x1xf32>
    %219 = arith.cmpf oge, %217, %218 : vector<1x1xf32>
    %220 = arith.select %219, %205, %203 : vector<1x1xi1>, vector<1x1xi32>
    %c524288_i32 = arith.constant 524288 : i32
    %221 = vector.broadcast %c524288_i32 : i32 to vector<1x1xi32>
    %222 = arith.ori %220, %221 : vector<1x1xi32>
    %c-2147483648_i32_40 = arith.constant -2147483648 : i32
    %223 = vector.broadcast %c-2147483648_i32_40 : i32 to vector<1x1xi32>
    %224 = arith.xori %222, %223 : vector<1x1xi32>
    %225 = vector.broadcast %224 : vector<1x1xi32> to vector<8x128xi32>
    %226 = arith.cmpi sge, %15, %225 : vector<8x128xi32>
    %227 = arith.andi %6, %226 : vector<8x128xi1>
    %228 = arith.extui %227 : vector<8x128xi1> to vector<8x128xi32>
    %229 = arith.sitofp %228 : vector<8x128xi32> to vector<8x128xf32>
    %230 = vector.shape_cast %229 : vector<8x128xf32> to vector<1x8x128xf32>
    %cst_41 = arith.constant dense<0.000000e+00> : vector<1xf32>
    %231 = vector.multi_reduction <add>, %230, %cst_41 [1, 2] : vector<1x8x128xf32> to vector<1xf32>
    %232 = vector.shape_cast %231 : vector<1xf32> to vector<1x1x1xf32>
    %233 = vector.extract %232[0, 0, 0] : f32 from vector<1x1x1xf32>
    %234 = vector.broadcast %233 : f32 to vector<1x1xf32>
    %cst_42 = arith.constant 6.400000e+01 : f32
    %235 = vector.broadcast %cst_42 : f32 to vector<1x1xf32>
    %236 = arith.cmpf oge, %234, %235 : vector<1x1xf32>
    %237 = arith.select %236, %222, %220 : vector<1x1xi1>, vector<1x1xi32>
    %c262144_i32 = arith.constant 262144 : i32
    %238 = vector.broadcast %c262144_i32 : i32 to vector<1x1xi32>
    %239 = arith.ori %237, %238 : vector<1x1xi32>
    %c-2147483648_i32_43 = arith.constant -2147483648 : i32
    %240 = vector.broadcast %c-2147483648_i32_43 : i32 to vector<1x1xi32>
    %241 = arith.xori %239, %240 : vector<1x1xi32>
    %242 = vector.broadcast %241 : vector<1x1xi32> to vector<8x128xi32>
    %243 = arith.cmpi sge, %15, %242 : vector<8x128xi32>
    %244 = arith.andi %6, %243 : vector<8x128xi1>
    %245 = arith.extui %244 : vector<8x128xi1> to vector<8x128xi32>
    %246 = arith.sitofp %245 : vector<8x128xi32> to vector<8x128xf32>
    %247 = vector.shape_cast %246 : vector<8x128xf32> to vector<1x8x128xf32>
    %cst_44 = arith.constant dense<0.000000e+00> : vector<1xf32>
    %248 = vector.multi_reduction <add>, %247, %cst_44 [1, 2] : vector<1x8x128xf32> to vector<1xf32>
    %249 = vector.shape_cast %248 : vector<1xf32> to vector<1x1x1xf32>
    %250 = vector.extract %249[0, 0, 0] : f32 from vector<1x1x1xf32>
    %251 = vector.broadcast %250 : f32 to vector<1x1xf32>
    %cst_45 = arith.constant 6.400000e+01 : f32
    %252 = vector.broadcast %cst_45 : f32 to vector<1x1xf32>
    %253 = arith.cmpf oge, %251, %252 : vector<1x1xf32>
    %254 = arith.select %253, %239, %237 : vector<1x1xi1>, vector<1x1xi32>
    %c131072_i32 = arith.constant 131072 : i32
    %255 = vector.broadcast %c131072_i32 : i32 to vector<1x1xi32>
    %256 = arith.ori %254, %255 : vector<1x1xi32>
    %c-2147483648_i32_46 = arith.constant -2147483648 : i32
    %257 = vector.broadcast %c-2147483648_i32_46 : i32 to vector<1x1xi32>
    %258 = arith.xori %256, %257 : vector<1x1xi32>
    %259 = vector.broadcast %258 : vector<1x1xi32> to vector<8x128xi32>
    %260 = arith.cmpi sge, %15, %259 : vector<8x128xi32>
    %261 = arith.andi %6, %260 : vector<8x128xi1>
    %262 = arith.extui %261 : vector<8x128xi1> to vector<8x128xi32>
    %263 = arith.sitofp %262 : vector<8x128xi32> to vector<8x128xf32>
    %264 = vector.shape_cast %263 : vector<8x128xf32> to vector<1x8x128xf32>
    %cst_47 = arith.constant dense<0.000000e+00> : vector<1xf32>
    %265 = vector.multi_reduction <add>, %264, %cst_47 [1, 2] : vector<1x8x128xf32> to vector<1xf32>
    %266 = vector.shape_cast %265 : vector<1xf32> to vector<1x1x1xf32>
    %267 = vector.extract %266[0, 0, 0] : f32 from vector<1x1x1xf32>
    %268 = vector.broadcast %267 : f32 to vector<1x1xf32>
    %cst_48 = arith.constant 6.400000e+01 : f32
    %269 = vector.broadcast %cst_48 : f32 to vector<1x1xf32>
    %270 = arith.cmpf oge, %268, %269 : vector<1x1xf32>
    %271 = arith.select %270, %256, %254 : vector<1x1xi1>, vector<1x1xi32>
    %c65536_i32 = arith.constant 65536 : i32
    %272 = vector.broadcast %c65536_i32 : i32 to vector<1x1xi32>
    %273 = arith.ori %271, %272 : vector<1x1xi32>
    %c-2147483648_i32_49 = arith.constant -2147483648 : i32
    %274 = vector.broadcast %c-2147483648_i32_49 : i32 to vector<1x1xi32>
    %275 = arith.xori %273, %274 : vector<1x1xi32>
    %276 = vector.broadcast %275 : vector<1x1xi32> to vector<8x128xi32>
    %277 = arith.cmpi sge, %15, %276 : vector<8x128xi32>
    %278 = arith.andi %6, %277 : vector<8x128xi1>
    %279 = arith.extui %278 : vector<8x128xi1> to vector<8x128xi32>
    %280 = arith.sitofp %279 : vector<8x128xi32> to vector<8x128xf32>
    %281 = vector.shape_cast %280 : vector<8x128xf32> to vector<1x8x128xf32>
    %cst_50 = arith.constant dense<0.000000e+00> : vector<1xf32>
    %282 = vector.multi_reduction <add>, %281, %cst_50 [1, 2] : vector<1x8x128xf32> to vector<1xf32>
    %283 = vector.shape_cast %282 : vector<1xf32> to vector<1x1x1xf32>
    %284 = vector.extract %283[0, 0, 0] : f32 from vector<1x1x1xf32>
    %285 = vector.broadcast %284 : f32 to vector<1x1xf32>
    %cst_51 = arith.constant 6.400000e+01 : f32
    %286 = vector.broadcast %cst_51 : f32 to vector<1x1xf32>
    %287 = arith.cmpf oge, %285, %286 : vector<1x1xf32>
    %288 = arith.select %287, %273, %271 : vector<1x1xi1>, vector<1x1xi32>
    %c32768_i32 = arith.constant 32768 : i32
    %289 = vector.broadcast %c32768_i32 : i32 to vector<1x1xi32>
    %290 = arith.ori %288, %289 : vector<1x1xi32>
    %c-2147483648_i32_52 = arith.constant -2147483648 : i32
    %291 = vector.broadcast %c-2147483648_i32_52 : i32 to vector<1x1xi32>
    %292 = arith.xori %290, %291 : vector<1x1xi32>
    %293 = vector.broadcast %292 : vector<1x1xi32> to vector<8x128xi32>
    %294 = arith.cmpi sge, %15, %293 : vector<8x128xi32>
    %295 = arith.andi %6, %294 : vector<8x128xi1>
    %296 = arith.extui %295 : vector<8x128xi1> to vector<8x128xi32>
    %297 = arith.sitofp %296 : vector<8x128xi32> to vector<8x128xf32>
    %298 = vector.shape_cast %297 : vector<8x128xf32> to vector<1x8x128xf32>
    %cst_53 = arith.constant dense<0.000000e+00> : vector<1xf32>
    %299 = vector.multi_reduction <add>, %298, %cst_53 [1, 2] : vector<1x8x128xf32> to vector<1xf32>
    %300 = vector.shape_cast %299 : vector<1xf32> to vector<1x1x1xf32>
    %301 = vector.extract %300[0, 0, 0] : f32 from vector<1x1x1xf32>
    %302 = vector.broadcast %301 : f32 to vector<1x1xf32>
    %cst_54 = arith.constant 6.400000e+01 : f32
    %303 = vector.broadcast %cst_54 : f32 to vector<1x1xf32>
    %304 = arith.cmpf oge, %302, %303 : vector<1x1xf32>
    %305 = arith.select %304, %290, %288 : vector<1x1xi1>, vector<1x1xi32>
    %c16384_i32 = arith.constant 16384 : i32
    %306 = vector.broadcast %c16384_i32 : i32 to vector<1x1xi32>
    %307 = arith.ori %305, %306 : vector<1x1xi32>
    %c-2147483648_i32_55 = arith.constant -2147483648 : i32
    %308 = vector.broadcast %c-2147483648_i32_55 : i32 to vector<1x1xi32>
    %309 = arith.xori %307, %308 : vector<1x1xi32>
    %310 = vector.broadcast %309 : vector<1x1xi32> to vector<8x128xi32>
    %311 = arith.cmpi sge, %15, %310 : vector<8x128xi32>
    %312 = arith.andi %6, %311 : vector<8x128xi1>
    %313 = arith.extui %312 : vector<8x128xi1> to vector<8x128xi32>
    %314 = arith.sitofp %313 : vector<8x128xi32> to vector<8x128xf32>
    %315 = vector.shape_cast %314 : vector<8x128xf32> to vector<1x8x128xf32>
    %cst_56 = arith.constant dense<0.000000e+00> : vector<1xf32>
    %316 = vector.multi_reduction <add>, %315, %cst_56 [1, 2] : vector<1x8x128xf32> to vector<1xf32>
    %317 = vector.shape_cast %316 : vector<1xf32> to vector<1x1x1xf32>
    %318 = vector.extract %317[0, 0, 0] : f32 from vector<1x1x1xf32>
    %319 = vector.broadcast %318 : f32 to vector<1x1xf32>
    %cst_57 = arith.constant 6.400000e+01 : f32
    %320 = vector.broadcast %cst_57 : f32 to vector<1x1xf32>
    %321 = arith.cmpf oge, %319, %320 : vector<1x1xf32>
    %322 = arith.select %321, %307, %305 : vector<1x1xi1>, vector<1x1xi32>
    %c8192_i32 = arith.constant 8192 : i32
    %323 = vector.broadcast %c8192_i32 : i32 to vector<1x1xi32>
    %324 = arith.ori %322, %323 : vector<1x1xi32>
    %c-2147483648_i32_58 = arith.constant -2147483648 : i32
    %325 = vector.broadcast %c-2147483648_i32_58 : i32 to vector<1x1xi32>
    %326 = arith.xori %324, %325 : vector<1x1xi32>
    %327 = vector.broadcast %326 : vector<1x1xi32> to vector<8x128xi32>
    %328 = arith.cmpi sge, %15, %327 : vector<8x128xi32>
    %329 = arith.andi %6, %328 : vector<8x128xi1>
    %330 = arith.extui %329 : vector<8x128xi1> to vector<8x128xi32>
    %331 = arith.sitofp %330 : vector<8x128xi32> to vector<8x128xf32>
    %332 = vector.shape_cast %331 : vector<8x128xf32> to vector<1x8x128xf32>
    %cst_59 = arith.constant dense<0.000000e+00> : vector<1xf32>
    %333 = vector.multi_reduction <add>, %332, %cst_59 [1, 2] : vector<1x8x128xf32> to vector<1xf32>
    %334 = vector.shape_cast %333 : vector<1xf32> to vector<1x1x1xf32>
    %335 = vector.extract %334[0, 0, 0] : f32 from vector<1x1x1xf32>
    %336 = vector.broadcast %335 : f32 to vector<1x1xf32>
    %cst_60 = arith.constant 6.400000e+01 : f32
    %337 = vector.broadcast %cst_60 : f32 to vector<1x1xf32>
    %338 = arith.cmpf oge, %336, %337 : vector<1x1xf32>
    %339 = arith.select %338, %324, %322 : vector<1x1xi1>, vector<1x1xi32>
    %c4096_i32 = arith.constant 4096 : i32
    %340 = vector.broadcast %c4096_i32 : i32 to vector<1x1xi32>
    %341 = arith.ori %339, %340 : vector<1x1xi32>
    %c-2147483648_i32_61 = arith.constant -2147483648 : i32
    %342 = vector.broadcast %c-2147483648_i32_61 : i32 to vector<1x1xi32>
    %343 = arith.xori %341, %342 : vector<1x1xi32>
    %344 = vector.broadcast %343 : vector<1x1xi32> to vector<8x128xi32>
    %345 = arith.cmpi sge, %15, %344 : vector<8x128xi32>
    %346 = arith.andi %6, %345 : vector<8x128xi1>
    %347 = arith.extui %346 : vector<8x128xi1> to vector<8x128xi32>
    %348 = arith.sitofp %347 : vector<8x128xi32> to vector<8x128xf32>
    %349 = vector.shape_cast %348 : vector<8x128xf32> to vector<1x8x128xf32>
    %cst_62 = arith.constant dense<0.000000e+00> : vector<1xf32>
    %350 = vector.multi_reduction <add>, %349, %cst_62 [1, 2] : vector<1x8x128xf32> to vector<1xf32>
    %351 = vector.shape_cast %350 : vector<1xf32> to vector<1x1x1xf32>
    %352 = vector.extract %351[0, 0, 0] : f32 from vector<1x1x1xf32>
    %353 = vector.broadcast %352 : f32 to vector<1x1xf32>
    %cst_63 = arith.constant 6.400000e+01 : f32
    %354 = vector.broadcast %cst_63 : f32 to vector<1x1xf32>
    %355 = arith.cmpf oge, %353, %354 : vector<1x1xf32>
    %356 = arith.select %355, %341, %339 : vector<1x1xi1>, vector<1x1xi32>
    %c2048_i32 = arith.constant 2048 : i32
    %357 = vector.broadcast %c2048_i32 : i32 to vector<1x1xi32>
    %358 = arith.ori %356, %357 : vector<1x1xi32>
    %c-2147483648_i32_64 = arith.constant -2147483648 : i32
    %359 = vector.broadcast %c-2147483648_i32_64 : i32 to vector<1x1xi32>
    %360 = arith.xori %358, %359 : vector<1x1xi32>
    %361 = vector.broadcast %360 : vector<1x1xi32> to vector<8x128xi32>
    %362 = arith.cmpi sge, %15, %361 : vector<8x128xi32>
    %363 = arith.andi %6, %362 : vector<8x128xi1>
    %364 = arith.extui %363 : vector<8x128xi1> to vector<8x128xi32>
    %365 = arith.sitofp %364 : vector<8x128xi32> to vector<8x128xf32>
    %366 = vector.shape_cast %365 : vector<8x128xf32> to vector<1x8x128xf32>
    %cst_65 = arith.constant dense<0.000000e+00> : vector<1xf32>
    %367 = vector.multi_reduction <add>, %366, %cst_65 [1, 2] : vector<1x8x128xf32> to vector<1xf32>
    %368 = vector.shape_cast %367 : vector<1xf32> to vector<1x1x1xf32>
    %369 = vector.extract %368[0, 0, 0] : f32 from vector<1x1x1xf32>
    %370 = vector.broadcast %369 : f32 to vector<1x1xf32>
    %cst_66 = arith.constant 6.400000e+01 : f32
    %371 = vector.broadcast %cst_66 : f32 to vector<1x1xf32>
    %372 = arith.cmpf oge, %370, %371 : vector<1x1xf32>
    %373 = arith.select %372, %358, %356 : vector<1x1xi1>, vector<1x1xi32>
    %c1024_i32_67 = arith.constant 1024 : i32
    %374 = vector.broadcast %c1024_i32_67 : i32 to vector<1x1xi32>
    %375 = arith.ori %373, %374 : vector<1x1xi32>
    %c-2147483648_i32_68 = arith.constant -2147483648 : i32
    %376 = vector.broadcast %c-2147483648_i32_68 : i32 to vector<1x1xi32>
    %377 = arith.xori %375, %376 : vector<1x1xi32>
    %378 = vector.broadcast %377 : vector<1x1xi32> to vector<8x128xi32>
    %379 = arith.cmpi sge, %15, %378 : vector<8x128xi32>
    %380 = arith.andi %6, %379 : vector<8x128xi1>
    %381 = arith.extui %380 : vector<8x128xi1> to vector<8x128xi32>
    %382 = arith.sitofp %381 : vector<8x128xi32> to vector<8x128xf32>
    %383 = vector.shape_cast %382 : vector<8x128xf32> to vector<1x8x128xf32>
    %cst_69 = arith.constant dense<0.000000e+00> : vector<1xf32>
    %384 = vector.multi_reduction <add>, %383, %cst_69 [1, 2] : vector<1x8x128xf32> to vector<1xf32>
    %385 = vector.shape_cast %384 : vector<1xf32> to vector<1x1x1xf32>
    %386 = vector.extract %385[0, 0, 0] : f32 from vector<1x1x1xf32>
    %387 = vector.broadcast %386 : f32 to vector<1x1xf32>
    %cst_70 = arith.constant 6.400000e+01 : f32
    %388 = vector.broadcast %cst_70 : f32 to vector<1x1xf32>
    %389 = arith.cmpf oge, %387, %388 : vector<1x1xf32>
    %390 = arith.select %389, %375, %373 : vector<1x1xi1>, vector<1x1xi32>
    %c512_i32 = arith.constant 512 : i32
    %391 = vector.broadcast %c512_i32 : i32 to vector<1x1xi32>
    %392 = arith.ori %390, %391 : vector<1x1xi32>
    %c-2147483648_i32_71 = arith.constant -2147483648 : i32
    %393 = vector.broadcast %c-2147483648_i32_71 : i32 to vector<1x1xi32>
    %394 = arith.xori %392, %393 : vector<1x1xi32>
    %395 = vector.broadcast %394 : vector<1x1xi32> to vector<8x128xi32>
    %396 = arith.cmpi sge, %15, %395 : vector<8x128xi32>
    %397 = arith.andi %6, %396 : vector<8x128xi1>
    %398 = arith.extui %397 : vector<8x128xi1> to vector<8x128xi32>
    %399 = arith.sitofp %398 : vector<8x128xi32> to vector<8x128xf32>
    %400 = vector.shape_cast %399 : vector<8x128xf32> to vector<1x8x128xf32>
    %cst_72 = arith.constant dense<0.000000e+00> : vector<1xf32>
    %401 = vector.multi_reduction <add>, %400, %cst_72 [1, 2] : vector<1x8x128xf32> to vector<1xf32>
    %402 = vector.shape_cast %401 : vector<1xf32> to vector<1x1x1xf32>
    %403 = vector.extract %402[0, 0, 0] : f32 from vector<1x1x1xf32>
    %404 = vector.broadcast %403 : f32 to vector<1x1xf32>
    %cst_73 = arith.constant 6.400000e+01 : f32
    %405 = vector.broadcast %cst_73 : f32 to vector<1x1xf32>
    %406 = arith.cmpf oge, %404, %405 : vector<1x1xf32>
    %407 = arith.select %406, %392, %390 : vector<1x1xi1>, vector<1x1xi32>
    %c256_i32 = arith.constant 256 : i32
    %408 = vector.broadcast %c256_i32 : i32 to vector<1x1xi32>
    %409 = arith.ori %407, %408 : vector<1x1xi32>
    %c-2147483648_i32_74 = arith.constant -2147483648 : i32
    %410 = vector.broadcast %c-2147483648_i32_74 : i32 to vector<1x1xi32>
    %411 = arith.xori %409, %410 : vector<1x1xi32>
    %412 = vector.broadcast %411 : vector<1x1xi32> to vector<8x128xi32>
    %413 = arith.cmpi sge, %15, %412 : vector<8x128xi32>
    %414 = arith.andi %6, %413 : vector<8x128xi1>
    %415 = arith.extui %414 : vector<8x128xi1> to vector<8x128xi32>
    %416 = arith.sitofp %415 : vector<8x128xi32> to vector<8x128xf32>
    %417 = vector.shape_cast %416 : vector<8x128xf32> to vector<1x8x128xf32>
    %cst_75 = arith.constant dense<0.000000e+00> : vector<1xf32>
    %418 = vector.multi_reduction <add>, %417, %cst_75 [1, 2] : vector<1x8x128xf32> to vector<1xf32>
    %419 = vector.shape_cast %418 : vector<1xf32> to vector<1x1x1xf32>
    %420 = vector.extract %419[0, 0, 0] : f32 from vector<1x1x1xf32>
    %421 = vector.broadcast %420 : f32 to vector<1x1xf32>
    %cst_76 = arith.constant 6.400000e+01 : f32
    %422 = vector.broadcast %cst_76 : f32 to vector<1x1xf32>
    %423 = arith.cmpf oge, %421, %422 : vector<1x1xf32>
    %424 = arith.select %423, %409, %407 : vector<1x1xi1>, vector<1x1xi32>
    %c128_i32_77 = arith.constant 128 : i32
    %425 = vector.broadcast %c128_i32_77 : i32 to vector<1x1xi32>
    %426 = arith.ori %424, %425 : vector<1x1xi32>
    %c-2147483648_i32_78 = arith.constant -2147483648 : i32
    %427 = vector.broadcast %c-2147483648_i32_78 : i32 to vector<1x1xi32>
    %428 = arith.xori %426, %427 : vector<1x1xi32>
    %429 = vector.broadcast %428 : vector<1x1xi32> to vector<8x128xi32>
    %430 = arith.cmpi sge, %15, %429 : vector<8x128xi32>
    %431 = arith.andi %6, %430 : vector<8x128xi1>
    %432 = arith.extui %431 : vector<8x128xi1> to vector<8x128xi32>
    %433 = arith.sitofp %432 : vector<8x128xi32> to vector<8x128xf32>
    %434 = vector.shape_cast %433 : vector<8x128xf32> to vector<1x8x128xf32>
    %cst_79 = arith.constant dense<0.000000e+00> : vector<1xf32>
    %435 = vector.multi_reduction <add>, %434, %cst_79 [1, 2] : vector<1x8x128xf32> to vector<1xf32>
    %436 = vector.shape_cast %435 : vector<1xf32> to vector<1x1x1xf32>
    %437 = vector.extract %436[0, 0, 0] : f32 from vector<1x1x1xf32>
    %438 = vector.broadcast %437 : f32 to vector<1x1xf32>
    %cst_80 = arith.constant 6.400000e+01 : f32
    %439 = vector.broadcast %cst_80 : f32 to vector<1x1xf32>
    %440 = arith.cmpf oge, %438, %439 : vector<1x1xf32>
    %441 = arith.select %440, %426, %424 : vector<1x1xi1>, vector<1x1xi32>
    %c64_i32 = arith.constant 64 : i32
    %442 = vector.broadcast %c64_i32 : i32 to vector<1x1xi32>
    %443 = arith.ori %441, %442 : vector<1x1xi32>
    %c-2147483648_i32_81 = arith.constant -2147483648 : i32
    %444 = vector.broadcast %c-2147483648_i32_81 : i32 to vector<1x1xi32>
    %445 = arith.xori %443, %444 : vector<1x1xi32>
    %446 = vector.broadcast %445 : vector<1x1xi32> to vector<8x128xi32>
    %447 = arith.cmpi sge, %15, %446 : vector<8x128xi32>
    %448 = arith.andi %6, %447 : vector<8x128xi1>
    %449 = arith.extui %448 : vector<8x128xi1> to vector<8x128xi32>
    %450 = arith.sitofp %449 : vector<8x128xi32> to vector<8x128xf32>
    %451 = vector.shape_cast %450 : vector<8x128xf32> to vector<1x8x128xf32>
    %cst_82 = arith.constant dense<0.000000e+00> : vector<1xf32>
    %452 = vector.multi_reduction <add>, %451, %cst_82 [1, 2] : vector<1x8x128xf32> to vector<1xf32>
    %453 = vector.shape_cast %452 : vector<1xf32> to vector<1x1x1xf32>
    %454 = vector.extract %453[0, 0, 0] : f32 from vector<1x1x1xf32>
    %455 = vector.broadcast %454 : f32 to vector<1x1xf32>
    %cst_83 = arith.constant 6.400000e+01 : f32
    %456 = vector.broadcast %cst_83 : f32 to vector<1x1xf32>
    %457 = arith.cmpf oge, %455, %456 : vector<1x1xf32>
    %458 = arith.select %457, %443, %441 : vector<1x1xi1>, vector<1x1xi32>
    %c32_i32 = arith.constant 32 : i32
    %459 = vector.broadcast %c32_i32 : i32 to vector<1x1xi32>
    %460 = arith.ori %458, %459 : vector<1x1xi32>
    %c-2147483648_i32_84 = arith.constant -2147483648 : i32
    %461 = vector.broadcast %c-2147483648_i32_84 : i32 to vector<1x1xi32>
    %462 = arith.xori %460, %461 : vector<1x1xi32>
    %463 = vector.broadcast %462 : vector<1x1xi32> to vector<8x128xi32>
    %464 = arith.cmpi sge, %15, %463 : vector<8x128xi32>
    %465 = arith.andi %6, %464 : vector<8x128xi1>
    %466 = arith.extui %465 : vector<8x128xi1> to vector<8x128xi32>
    %467 = arith.sitofp %466 : vector<8x128xi32> to vector<8x128xf32>
    %468 = vector.shape_cast %467 : vector<8x128xf32> to vector<1x8x128xf32>
    %cst_85 = arith.constant dense<0.000000e+00> : vector<1xf32>
    %469 = vector.multi_reduction <add>, %468, %cst_85 [1, 2] : vector<1x8x128xf32> to vector<1xf32>
    %470 = vector.shape_cast %469 : vector<1xf32> to vector<1x1x1xf32>
    %471 = vector.extract %470[0, 0, 0] : f32 from vector<1x1x1xf32>
    %472 = vector.broadcast %471 : f32 to vector<1x1xf32>
    %cst_86 = arith.constant 6.400000e+01 : f32
    %473 = vector.broadcast %cst_86 : f32 to vector<1x1xf32>
    %474 = arith.cmpf oge, %472, %473 : vector<1x1xf32>
    %475 = arith.select %474, %460, %458 : vector<1x1xi1>, vector<1x1xi32>
    %c16_i32 = arith.constant 16 : i32
    %476 = vector.broadcast %c16_i32 : i32 to vector<1x1xi32>
    %477 = arith.ori %475, %476 : vector<1x1xi32>
    %c-2147483648_i32_87 = arith.constant -2147483648 : i32
    %478 = vector.broadcast %c-2147483648_i32_87 : i32 to vector<1x1xi32>
    %479 = arith.xori %477, %478 : vector<1x1xi32>
    %480 = vector.broadcast %479 : vector<1x1xi32> to vector<8x128xi32>
    %481 = arith.cmpi sge, %15, %480 : vector<8x128xi32>
    %482 = arith.andi %6, %481 : vector<8x128xi1>
    %483 = arith.extui %482 : vector<8x128xi1> to vector<8x128xi32>
    %484 = arith.sitofp %483 : vector<8x128xi32> to vector<8x128xf32>
    %485 = vector.shape_cast %484 : vector<8x128xf32> to vector<1x8x128xf32>
    %cst_88 = arith.constant dense<0.000000e+00> : vector<1xf32>
    %486 = vector.multi_reduction <add>, %485, %cst_88 [1, 2] : vector<1x8x128xf32> to vector<1xf32>
    %487 = vector.shape_cast %486 : vector<1xf32> to vector<1x1x1xf32>
    %488 = vector.extract %487[0, 0, 0] : f32 from vector<1x1x1xf32>
    %489 = vector.broadcast %488 : f32 to vector<1x1xf32>
    %cst_89 = arith.constant 6.400000e+01 : f32
    %490 = vector.broadcast %cst_89 : f32 to vector<1x1xf32>
    %491 = arith.cmpf oge, %489, %490 : vector<1x1xf32>
    %492 = arith.select %491, %477, %475 : vector<1x1xi1>, vector<1x1xi32>
    %c8_i32 = arith.constant 8 : i32
    %493 = vector.broadcast %c8_i32 : i32 to vector<1x1xi32>
    %494 = arith.ori %492, %493 : vector<1x1xi32>
    %c-2147483648_i32_90 = arith.constant -2147483648 : i32
    %495 = vector.broadcast %c-2147483648_i32_90 : i32 to vector<1x1xi32>
    %496 = arith.xori %494, %495 : vector<1x1xi32>
    %497 = vector.broadcast %496 : vector<1x1xi32> to vector<8x128xi32>
    %498 = arith.cmpi sge, %15, %497 : vector<8x128xi32>
    %499 = arith.andi %6, %498 : vector<8x128xi1>
    %500 = arith.extui %499 : vector<8x128xi1> to vector<8x128xi32>
    %501 = arith.sitofp %500 : vector<8x128xi32> to vector<8x128xf32>
    %502 = vector.shape_cast %501 : vector<8x128xf32> to vector<1x8x128xf32>
    %cst_91 = arith.constant dense<0.000000e+00> : vector<1xf32>
    %503 = vector.multi_reduction <add>, %502, %cst_91 [1, 2] : vector<1x8x128xf32> to vector<1xf32>
    %504 = vector.shape_cast %503 : vector<1xf32> to vector<1x1x1xf32>
    %505 = vector.extract %504[0, 0, 0] : f32 from vector<1x1x1xf32>
    %506 = vector.broadcast %505 : f32 to vector<1x1xf32>
    %cst_92 = arith.constant 6.400000e+01 : f32
    %507 = vector.broadcast %cst_92 : f32 to vector<1x1xf32>
    %508 = arith.cmpf oge, %506, %507 : vector<1x1xf32>
    %509 = arith.select %508, %494, %492 : vector<1x1xi1>, vector<1x1xi32>
    %c4_i32 = arith.constant 4 : i32
    %510 = vector.broadcast %c4_i32 : i32 to vector<1x1xi32>
    %511 = arith.ori %509, %510 : vector<1x1xi32>
    %c-2147483648_i32_93 = arith.constant -2147483648 : i32
    %512 = vector.broadcast %c-2147483648_i32_93 : i32 to vector<1x1xi32>
    %513 = arith.xori %511, %512 : vector<1x1xi32>
    %514 = vector.broadcast %513 : vector<1x1xi32> to vector<8x128xi32>
    %515 = arith.cmpi sge, %15, %514 : vector<8x128xi32>
    %516 = arith.andi %6, %515 : vector<8x128xi1>
    %517 = arith.extui %516 : vector<8x128xi1> to vector<8x128xi32>
    %518 = arith.sitofp %517 : vector<8x128xi32> to vector<8x128xf32>
    %519 = vector.shape_cast %518 : vector<8x128xf32> to vector<1x8x128xf32>
    %cst_94 = arith.constant dense<0.000000e+00> : vector<1xf32>
    %520 = vector.multi_reduction <add>, %519, %cst_94 [1, 2] : vector<1x8x128xf32> to vector<1xf32>
    %521 = vector.shape_cast %520 : vector<1xf32> to vector<1x1x1xf32>
    %522 = vector.extract %521[0, 0, 0] : f32 from vector<1x1x1xf32>
    %523 = vector.broadcast %522 : f32 to vector<1x1xf32>
    %cst_95 = arith.constant 6.400000e+01 : f32
    %524 = vector.broadcast %cst_95 : f32 to vector<1x1xf32>
    %525 = arith.cmpf oge, %523, %524 : vector<1x1xf32>
    %526 = arith.select %525, %511, %509 : vector<1x1xi1>, vector<1x1xi32>
    %c2_i32 = arith.constant 2 : i32
    %527 = vector.broadcast %c2_i32 : i32 to vector<1x1xi32>
    %528 = arith.ori %526, %527 : vector<1x1xi32>
    %c-2147483648_i32_96 = arith.constant -2147483648 : i32
    %529 = vector.broadcast %c-2147483648_i32_96 : i32 to vector<1x1xi32>
    %530 = arith.xori %528, %529 : vector<1x1xi32>
    %531 = vector.broadcast %530 : vector<1x1xi32> to vector<8x128xi32>
    %532 = arith.cmpi sge, %15, %531 : vector<8x128xi32>
    %533 = arith.andi %6, %532 : vector<8x128xi1>
    %534 = arith.extui %533 : vector<8x128xi1> to vector<8x128xi32>
    %535 = arith.sitofp %534 : vector<8x128xi32> to vector<8x128xf32>
    %536 = vector.shape_cast %535 : vector<8x128xf32> to vector<1x8x128xf32>
    %cst_97 = arith.constant dense<0.000000e+00> : vector<1xf32>
    %537 = vector.multi_reduction <add>, %536, %cst_97 [1, 2] : vector<1x8x128xf32> to vector<1xf32>
    %538 = vector.shape_cast %537 : vector<1xf32> to vector<1x1x1xf32>
    %539 = vector.extract %538[0, 0, 0] : f32 from vector<1x1x1xf32>
    %540 = vector.broadcast %539 : f32 to vector<1x1xf32>
    %cst_98 = arith.constant 6.400000e+01 : f32
    %541 = vector.broadcast %cst_98 : f32 to vector<1x1xf32>
    %542 = arith.cmpf oge, %540, %541 : vector<1x1xf32>
    %543 = arith.select %542, %528, %526 : vector<1x1xi1>, vector<1x1xi32>
    %c1_i32 = arith.constant 1 : i32
    %544 = vector.broadcast %c1_i32 : i32 to vector<1x1xi32>
    %545 = arith.ori %543, %544 : vector<1x1xi32>
    %c-2147483648_i32_99 = arith.constant -2147483648 : i32
    %546 = vector.broadcast %c-2147483648_i32_99 : i32 to vector<1x1xi32>
    %547 = arith.xori %545, %546 : vector<1x1xi32>
    %548 = vector.broadcast %547 : vector<1x1xi32> to vector<8x128xi32>
    %549 = arith.cmpi sge, %15, %548 : vector<8x128xi32>
    %550 = arith.andi %6, %549 : vector<8x128xi1>
    %551 = arith.extui %550 : vector<8x128xi1> to vector<8x128xi32>
    %552 = arith.sitofp %551 : vector<8x128xi32> to vector<8x128xf32>
    %553 = vector.shape_cast %552 : vector<8x128xf32> to vector<1x8x128xf32>
    %cst_100 = arith.constant dense<0.000000e+00> : vector<1xf32>
    %554 = vector.multi_reduction <add>, %553, %cst_100 [1, 2] : vector<1x8x128xf32> to vector<1xf32>
    %555 = vector.shape_cast %554 : vector<1xf32> to vector<1x1x1xf32>
    %556 = vector.extract %555[0, 0, 0] : f32 from vector<1x1x1xf32>
    %557 = vector.broadcast %556 : f32 to vector<1x1xf32>
    %cst_101 = arith.constant 6.400000e+01 : f32
    %558 = vector.broadcast %cst_101 : f32 to vector<1x1xf32>
    %559 = arith.cmpf oge, %557, %558 : vector<1x1xf32>
    %560 = arith.select %559, %545, %543 : vector<1x1xi1>, vector<1x1xi32>
    %c-2147483648_i32_102 = arith.constant -2147483648 : i32
    %561 = vector.broadcast %c-2147483648_i32_102 : i32 to vector<1x1xi32>
    %562 = arith.xori %560, %561 : vector<1x1xi32>
    %563 = vector.broadcast %562 : vector<1x1xi32> to vector<8x128xi32>
    %564 = arith.cmpi sge, %15, %563 : vector<8x128xi32>
    %565 = arith.andi %6, %564 : vector<8x128xi1>
    %566 = arith.extui %565 : vector<8x128xi1> to vector<8x128xi32>
    %567 = arith.sitofp %566 : vector<8x128xi32> to vector<8x128xf32>
    %c0_103 = arith.constant 0 : index
    %c0_104 = arith.constant 0 : index
    %568 = vector.load %arg2[%c0_103, %c0_104] : memref<8x128xf32, #tpu.memory_space<vmem>>, vector<8x128xf32>
    %569 = arith.cmpf ogt, %567, %568 : vector<8x128xf32>
    %570 = arith.extui %569 : vector<8x128xi1> to vector<8x128xi32>
    %571 = arith.sitofp %570 : vector<8x128xi32> to vector<8x128xf32>
    %c0_105 = arith.constant 0 : index
    %c0_106 = arith.constant 0 : index
    %572 = vector.load %arg3[%c0_105, %c0_106] : memref<8x128xf32, #tpu.memory_space<vmem>>, vector<8x128xf32>
    tpu.vector_store %arg3[%c0_105, %c0_106], %571 {strides = array<i32>} : memref<8x128xf32, #tpu.memory_space<vmem>>, vector<8x128xf32>,
    return
  }
}

</mosaic_0001>

<llo_original>
// kernel: tpu_custom_call.1
$region0: #{tpu_custom_call.1}
  #allocation0 [shape = 'u32[]', space=smem, size = 0x4, offset = 0x4, fixed_abs, tag = 'smem constant byte address 0x4 - core index']
  #allocation1 [shape = 'u32[144,128]{1,0:T(1,128)}', space=vmem, size = 0x12000, scoped, tag = 'internal scratch']
  %s0 = inlined_call_operand.hbm [shape: f32[8,128], index: 0, kind: input, shape index: {}]
  %s1 = inlined_call_operand.hbm [shape: f32[8,128], index: 1, kind: input, shape index: {}]
  %s2 = inlined_call_operand.hbm [shape: f32[8,128], index: 2, kind: input, shape index: {}]
  %s3 = inlined_call_operand.hbm [shape: f32[8,128], index: 3, kind: output, shape index: {}]
  %s4 = sld [smem:[#allocation0]]
  $region34: #{tpu_custom_call.1} parent=0
    _
  %s6 = ssub.s32 1, %s4
  %s7 = scalar_select 0, %s6, %s4
  $region1: #{tpu_custom_call.1} parent=0
    #allocation2 [shape = 'u8[4096]{0}', space=vmem, size = 0x1000, scoped, tag = 'input window, operand 0, single buffered']
    #allocation3 [shape = 's32[1]{0}', space=sflag, size = 0x4, scoped, tag = 'scoped memory for tpu_custom_call.1']
    #allocation4 [shape = 's32[1]{0}', space=sflag, size = 0x4, scoped, tag = 'scoped memory for tpu_custom_call.1']
    #allocation5 [shape = 'u8[4096]{0}', space=vmem, size = 0x1000, scoped, tag = 'input window, operand 1, single buffered']
    #allocation6 [shape = 's32[1]{0}', space=sflag, size = 0x4, scoped, tag = 'scoped memory for tpu_custom_call.1']
    #allocation7 [shape = 'u8[4096]{0}', space=vmem, size = 0x1000, scoped, tag = 'input window, operand 2, single buffered']
    #allocation8 [shape = 'u8[4096]{0}', space=vmem, size = 0x1000, scoped, tag = 'output window, operand 0, single buffered']
    %8 = vsyncpa [#allocation3], 0
    %9 = vsyncpa [#allocation6], 0
    %10 = vsyncpa [#allocation4], 0
    // Predicated region
    $region2: #{tpu_custom_call.1} parent=1 // pred_check
      _
    $region3: #{tpu_custom_call.1} parent=1 // pred_check_branch
      %12 = sbr.rel (0) target = $region5
    $region4: #{tpu_custom_call.1} parent=1 // pred_region
      %s14 = ssub.s32 128, 128
      %15 = vsyncadd [#allocation3], %s14
      %s17 = sshll.u32 [#allocation2], 4
      %s18 = int_to_ptr.vmem [resolvable:$true] %s17
      %20 = dma.hbm_to_vmem [thread:$0]  %s0, 128, %s18, [#allocation3]
    $region5: #{tpu_custom_call.1} parent=1 // pred_fallthru
      _
    // Predicated region
    $region6: #{tpu_custom_call.1} parent=1 // pred_check
      _
    $region7: #{tpu_custom_call.1} parent=1 // pred_check_branch
      %22 = sbr.rel (0) target = $region9
    $region8: #{tpu_custom_call.1} parent=1 // pred_region
      %s24 = ssub.s32 128, 128
      %25 = vsyncadd [#allocation6], %s24
      %s27 = sshll.u32 [#allocation5], 4
      %s28 = int_to_ptr.vmem [resolvable:$true] %s27
      %30 = dma.hbm_to_vmem [thread:$0]  %s1, 128, %s28, [#allocation6]
    $region9: #{tpu_custom_call.1} parent=1 // pred_fallthru
      _
    // Predicated region
    $region10: #{tpu_custom_call.1} parent=1 // pred_check
      _
    $region11: #{tpu_custom_call.1} parent=1 // pred_check_branch
      %32 = sbr.rel (0) target = $region13
    $region12: #{tpu_custom_call.1} parent=1 // pred_region
      %s34 = ssub.s32 128, 128
      %35 = vsyncadd [#allocation6], %s34
      %s37 = sshll.u32 [#allocation7], 4
      %s38 = int_to_ptr.vmem [resolvable:$true] %s37
      %40 = dma.hbm_to_vmem [thread:$0]  %s2, 128, %s38, [#allocation6]
    $region13: #{tpu_custom_call.1} parent=1 // pred_fallthru
      _
    // Predicated region
    $region14: #{tpu_custom_call.1} parent=1 // pred_check
      _
    $region15: #{tpu_custom_call.1} parent=1 // pred_check_branch
      %42 = sbr.rel (0) target = $region17
    $region16: #{tpu_custom_call.1} parent=1 // pred_region
      %43 = dma.done [#allocation3], 128
    $region17: #{tpu_custom_call.1} parent=1 // pred_fallthru
      _
    // Predicated region
    $region18: #{tpu_custom_call.1} parent=1 // pred_check
      _
    $region19: #{tpu_custom_call.1} parent=1 // pred_check_branch
      %45 = sbr.rel (0) target = $region21
    $region20: #{tpu_custom_call.1} parent=1 // pred_region
      %46 = dma.done [#allocation6], 128
    $region21: #{tpu_custom_call.1} parent=1 // pred_fallthru
      _
    // Predicated region
    $region22: #{tpu_custom_call.1} parent=1 // pred_check
      _
    $region23: #{tpu_custom_call.1} parent=1 // pred_check_branch
      %48 = sbr.rel (0) target = $region25
    $region24: #{tpu_custom_call.1} parent=1 // pred_region
      %49 = dma.done [#allocation6], 128
    $region25: #{tpu_custom_call.1} parent=1 // pred_fallthru
      _
    %v50 = vlaneseq
    %v51 = vshrl.u32 %v50, 7
    %v52 = vlaneseq
    %v53 = vand.u32 %v52, 127
    %v54 = vmul.u32 %v51, 128
    %v55 = vadd.s32 %v54, %v53
    %vm56 = vcmp.lt.s32.totalorder %v55, 1024
    %v57 = vld [vmem:[#allocation2] sm:$0xff]
    %v58 = vld [vmem:[#allocation5] sm:$0xff]
    %v59 = vadd.f32 %v57, %v58
    %vm61 = vcmp.lt.s32.totalorder %v59, 0
    %v62 = vsub.s32 2147483648, %v59
    %v63 = vsel %vm61, %v62, %v59
    %vm64 = vcmp.ge.s32.totalorder %v63, 0
    %vm65 = vmand %vm56, %vm64
    %v66 = vsel %vm65, 1, 0
    %v67 = vcvt.s32.f32 %v66
    %68 = vadd.xlane.f32.xlu0 %v67
    %v69 = vpop.xlane.xlu0 %68
    %v70 = vrot.slane %v69, 4
    %v71 = vadd.f32 %v69, %v70
    %v72 = vrot.slane %v71, 2
    %v73 = vadd.f32 %v71, %v72
    %v74 = vrot.slane %v73, 1
    %v75 = vadd.f32 %v73, %v74
    %s76 = vtos %v75
    %v77 = vstv %s76
    %vm78 = vcmp.ge.f32.partialorder %v77, 64.0
    %v79 = vsel %vm78, 2147483648, 0
    %v80 = vor.u32 %v79, 1073741824
    %v81 = vxor.u32 %v80, 2147483648
    %vm82 = vcmp.ge.s32.totalorder %v63, %v81
    %vm83 = vmand %vm56, %vm82
    %v84 = vsel %vm83, 1, 0
    %v85 = vcvt.s32.f32 %v84
    %86 = vadd.xlane.f32.xlu0 %v85
    %v87 = vpop.xlane.xlu0 %86
    %v88 = vrot.slane %v87, 4
    %v89 = vadd.f32 %v87, %v88
    %v90 = vrot.slane %v89, 2
    %v91 = vadd.f32 %v89, %v90
    %v92 = vrot.slane %v91, 1
    %v93 = vadd.f32 %v91, %v92
    %s94 = vtos %v93
    %v95 = vstv %s94
    %vm96 = vcmp.ge.f32.partialorder %v95, 64.0
    %v97 = vsel %vm96, %v80, %v79
    %v98 = vor.u32 %v97, 536870912
    %v99 = vxor.u32 %v98, 2147483648
    %vm100 = vcmp.ge.s32.totalorder %v63, %v99
    %vm101 = vmand %vm56, %vm100
    %v102 = vsel %vm101, 1, 0
    %v103 = vcvt.s32.f32 %v102
    %104 = vadd.xlane.f32.xlu0 %v103
    %v105 = vpop.xlane.xlu0 %104
    %v106 = vrot.slane %v105, 4
    %v107 = vadd.f32 %v105, %v106
    %v108 = vrot.slane %v107, 2
    %v109 = vadd.f32 %v107, %v108
    %v110 = vrot.slane %v109, 1
    %v111 = vadd.f32 %v109, %v110
    %s112 = vtos %v111
    %v113 = vstv %s112
    %vm114 = vcmp.ge.f32.partialorder %v113, 64.0
    %v115 = vsel %vm114, %v98, %v97
    %v116 = vor.u32 %v115, 268435456
    %v117 = vxor.u32 %v116, 2147483648
    %vm118 = vcmp.ge.s32.totalorder %v63, %v117
    %vm119 = vmand %vm56, %vm118
    %v120 = vsel %vm119, 1, 0
    %v121 = vcvt.s32.f32 %v120
    %122 = vadd.xlane.f32.xlu0 %v121
    %v123 = vpop.xlane.xlu0 %122
    %v124 = vrot.slane %v123, 4
    %v125 = vadd.f32 %v123, %v124
    %v126 = vrot.slane %v125, 2
    %v127 = vadd.f32 %v125, %v126
    %v128 = vrot.slane %v127, 1
    %v129 = vadd.f32 %v127, %v128
    %s130 = vtos %v129
    %v131 = vstv %s130
    %vm132 = vcmp.ge.f32.partialorder %v131, 64.0
    %v133 = vsel %vm132, %v116, %v115
    %v134 = vor.u32 %v133, 134217728
    %v135 = vxor.u32 %v134, 2147483648
    %vm136 = vcmp.ge.s32.totalorder %v63, %v135
    %vm137 = vmand %vm56, %vm136
    %v138 = vsel %vm137, 1, 0
    %v139 = vcvt.s32.f32 %v138
    %140 = vadd.xlane.f32.xlu0 %v139
    %v141 = vpop.xlane.xlu0 %140
    %v142 = vrot.slane %v141, 4
    %v143 = vadd.f32 %v141, %v142
    %v144 = vrot.slane %v143, 2
    %v145 = vadd.f32 %v143, %v144
    %v146 = vrot.slane %v145, 1
    %v147 = vadd.f32 %v145, %v146
    %s148 = vtos %v147
    %v149 = vstv %s148
    %vm150 = vcmp.ge.f32.partialorder %v149, 64.0
    %v151 = vsel %vm150, %v134, %v133
    %v152 = vor.u32 %v151, 67108864
    %v153 = vxor.u32 %v152, 2147483648
    %vm154 = vcmp.ge.s32.totalorder %v63, %v153
    %vm155 = vmand %vm56, %vm154
    %v156 = vsel %vm155, 1, 0
    %v157 = vcvt.s32.f32 %v156
    %158 = vadd.xlane.f32.xlu0 %v157
    %v159 = vpop.xlane.xlu0 %158
    %v160 = vrot.slane %v159, 4
    %v161 = vadd.f32 %v159, %v160
    %v162 = vrot.slane %v161, 2
    %v163 = vadd.f32 %v161, %v162
    %v164 = vrot.slane %v163, 1
    %v165 = vadd.f32 %v163, %v164
    %s166 = vtos %v165
    %v167 = vstv %s166
    %vm168 = vcmp.ge.f32.partialorder %v167, 64.0
    %v169 = vsel %vm168, %v152, %v151
    %v170 = vor.u32 %v169, 33554432
    %v171 = vxor.u32 %v170, 2147483648
    %vm172 = vcmp.ge.s32.totalorder %v63, %v171
    %vm173 = vmand %vm56, %vm172
    %v174 = vsel %vm173, 1, 0
    %v175 = vcvt.s32.f32 %v174
    %176 = vadd.xlane.f32.xlu0 %v175
    %v177 = vpop.xlane.xlu0 %176
    %v178 = vrot.slane %v177, 4
    %v179 = vadd.f32 %v177, %v178
    %v180 = vrot.slane %v179, 2
    %v181 = vadd.f32 %v179, %v180
    %v182 = vrot.slane %v181, 1
    %v183 = vadd.f32 %v181, %v182
    %s184 = vtos %v183
    %v185 = vstv %s184
    %vm186 = vcmp.ge.f32.partialorder %v185, 64.0
    %v187 = vsel %vm186, %v170, %v169
    %v188 = vor.u32 %v187, 16777216
    %v189 = vxor.u32 %v188, 2147483648
    %vm190 = vcmp.ge.s32.totalorder %v63, %v189
    %vm191 = vmand %vm56, %vm190
    %v192 = vsel %vm191, 1, 0
    %v193 = vcvt.s32.f32 %v192
    %194 = vadd.xlane.f32.xlu0 %v193
    %v195 = vpop.xlane.xlu0 %194
    %v196 = vrot.slane %v195, 4
    %v197 = vadd.f32 %v195, %v196
    %v198 = vrot.slane %v197, 2
    %v199 = vadd.f32 %v197, %v198
    %v200 = vrot.slane %v199, 1
    %v201 = vadd.f32 %v199, %v200
    %s202 = vtos %v201
    %v203 = vstv %s202
    %vm204 = vcmp.ge.f32.partialorder %v203, 64.0
    %v205 = vsel %vm204, %v188, %v187
    %v206 = vor.u32 %v205, 8388608
    %v207 = vxor.u32 %v206, 2147483648
    %vm208 = vcmp.ge.s32.totalorder %v63, %v207
    %vm209 = vmand %vm56, %vm208
    %v210 = vsel %vm209, 1, 0
    %v211 = vcvt.s32.f32 %v210
    %212 = vadd.xlane.f32.xlu0 %v211
    %v213 = vpop.xlane.xlu0 %212
    %v214 = vrot.slane %v213, 4
    %v215 = vadd.f32 %v213, %v214
    %v216 = vrot.slane %v215, 2
    %v217 = vadd.f32 %v215, %v216
    %v218 = vrot.slane %v217, 1
    %v219 = vadd.f32 %v217, %v218
    %s220 = vtos %v219
    %v221 = vstv %s220
    %vm222 = vcmp.ge.f32.partialorder %v221, 64.0
    %v223 = vsel %vm222, %v206, %v205
    %v224 = vor.u32 %v223, 4194304
    %v225 = vxor.u32 %v224, 2147483648
    %vm226 = vcmp.ge.s32.totalorder %v63, %v225
    %vm227 = vmand %vm56, %vm226
    %v228 = vsel %vm227, 1, 0
    %v229 = vcvt.s32.f32 %v228
    %230 = vadd.xlane.f32.xlu0 %v229
    %v231 = vpop.xlane.xlu0 %230
    %v232 = vrot.slane %v231, 4
    %v233 = vadd.f32 %v231, %v232
    %v234 = vrot.slane %v233, 2
    %v235 = vadd.f32 %v233, %v234
    %v236 = vrot.slane %v235, 1
    %v237 = vadd.f32 %v235, %v236
    %s238 = vtos %v237
    %v239 = vstv %s238
    %vm240 = vcmp.ge.f32.partialorder %v239, 64.0
    %v241 = vsel %vm240, %v224, %v223
    %v242 = vor.u32 %v241, 2097152
    %v243 = vxor.u32 %v242, 2147483648
    %vm244 = vcmp.ge.s32.totalorder %v63, %v243
    %vm245 = vmand %vm56, %vm244
    %v246 = vsel %vm245, 1, 0
    %v247 = vcvt.s32.f32 %v246
    %248 = vadd.xlane.f32.xlu0 %v247
    %v249 = vpop.xlane.xlu0 %248
    %v250 = vrot.slane %v249, 4
    %v251 = vadd.f32 %v249, %v250
    %v252 = vrot.slane %v251, 2
    %v253 = vadd.f32 %v251, %v252
    %v254 = vrot.slane %v253, 1
    %v255 = vadd.f32 %v253, %v254
    %s256 = vtos %v255
    %v257 = vstv %s256
    %vm258 = vcmp.ge.f32.partialorder %v257, 64.0
    %v259 = vsel %vm258, %v242, %v241
    %v260 = vor.u32 %v259, 1048576
    %v261 = vxor.u32 %v260, 2147483648
    %vm262 = vcmp.ge.s32.totalorder %v63, %v261
    %vm263 = vmand %vm56, %vm262
    %v264 = vsel %vm263, 1, 0
    %v265 = vcvt.s32.f32 %v264
    %266 = vadd.xlane.f32.xlu0 %v265
    %v267 = vpop.xlane.xlu0 %266
    %v268 = vrot.slane %v267, 4
    %v269 = vadd.f32 %v267, %v268
    %v270 = vrot.slane %v269, 2
    %v271 = vadd.f32 %v269, %v270
    %v272 = vrot.slane %v271, 1
    %v273 = vadd.f32 %v271, %v272
    %s274 = vtos %v273
    %v275 = vstv %s274
    %vm276 = vcmp.ge.f32.partialorder %v275, 64.0
    %v277 = vsel %vm276, %v260, %v259
    %v278 = vor.u32 %v277, 524288
    %v279 = vxor.u32 %v278, 2147483648
    %vm280 = vcmp.ge.s32.totalorder %v63, %v279
    %vm281 = vmand %vm56, %vm280
    %v282 = vsel %vm281, 1, 0
    %v283 = vcvt.s32.f32 %v282
    %284 = vadd.xlane.f32.xlu0 %v283
    %v285 = vpop.xlane.xlu0 %284
    %v286 = vrot.slane %v285, 4
    %v287 = vadd.f32 %v285, %v286
    %v288 = vrot.slane %v287, 2
    %v289 = vadd.f32 %v287, %v288
    %v290 = vrot.slane %v289, 1
    %v291 = vadd.f32 %v289, %v290
    %s292 = vtos %v291
    %v293 = vstv %s292
    %vm294 = vcmp.ge.f32.partialorder %v293, 64.0
    %v295 = vsel %vm294, %v278, %v277
    %v296 = vor.u32 %v295, 262144
    %v297 = vxor.u32 %v296, 2147483648
    %vm298 = vcmp.ge.s32.totalorder %v63, %v297
    %vm299 = vmand %vm56, %vm298
    %v300 = vsel %vm299, 1, 0
    %v301 = vcvt.s32.f32 %v300
    %302 = vadd.xlane.f32.xlu0 %v301
    %v303 = vpop.xlane.xlu0 %302
    %v304 = vrot.slane %v303, 4
    %v305 = vadd.f32 %v303, %v304
    %v306 = vrot.slane %v305, 2
    %v307 = vadd.f32 %v305, %v306
    %v308 = vrot.slane %v307, 1
    %v309 = vadd.f32 %v307, %v308
    %s310 = vtos %v309
    %v311 = vstv %s310
    %vm312 = vcmp.ge.f32.partialorder %v311, 64.0
    %v313 = vsel %vm312, %v296, %v295
    %v314 = vor.u32 %v313, 131072
    %v315 = vxor.u32 %v314, 2147483648
    %vm316 = vcmp.ge.s32.totalorder %v63, %v315
    %vm317 = vmand %vm56, %vm316
    %v318 = vsel %vm317, 1, 0
    %v319 = vcvt.s32.f32 %v318
    %320 = vadd.xlane.f32.xlu0 %v319
    %v321 = vpop.xlane.xlu0 %320
    %v322 = vrot.slane %v321, 4
    %v323 = vadd.f32 %v321, %v322
    %v324 = vrot.slane %v323, 2
    %v325 = vadd.f32 %v323, %v324
    %v326 = vrot.slane %v325, 1
    %v327 = vadd.f32 %v325, %v326
    %s328 = vtos %v327
    %v329 = vstv %s328
    %vm330 = vcmp.ge.f32.partialorder %v329, 64.0
    %v331 = vsel %vm330, %v314, %v313
    %v332 = vor.u32 %v331, 65536
    %v333 = vxor.u32 %v332, 2147483648
    %vm334 = vcmp.ge.s32.totalorder %v63, %v333
    %vm335 = vmand %vm56, %vm334
    %v336 = vsel %vm335, 1, 0
    %v337 = vcvt.s32.f32 %v336
    %338 = vadd.xlane.f32.xlu0 %v337
    %v339 = vpop.xlane.xlu0 %338
    %v340 = vrot.slane %v339, 4
    %v341 = vadd.f32 %v339, %v340
    %v342 = vrot.slane %v341, 2
    %v343 = vadd.f32 %v341, %v342
    %v344 = vrot.slane %v343, 1
    %v345 = vadd.f32 %v343, %v344
    %s346 = vtos %v345
    %v347 = vstv %s346
    %vm348 = vcmp.ge.f32.partialorder %v347, 64.0
    %v349 = vsel %vm348, %v332, %v331
    %v350 = vor.u32 %v349, 32768
    %v351 = vxor.u32 %v350, 2147483648
    %vm352 = vcmp.ge.s32.totalorder %v63, %v351
    %vm353 = vmand %vm56, %vm352
    %v354 = vsel %vm353, 1, 0
    %v355 = vcvt.s32.f32 %v354
    %356 = vadd.xlane.f32.xlu0 %v355
    %v357 = vpop.xlane.xlu0 %356
    %v358 = vrot.slane %v357, 4
    %v359 = vadd.f32 %v357, %v358
    %v360 = vrot.slane %v359, 2
    %v361 = vadd.f32 %v359, %v360
    %v362 = vrot.slane %v361, 1
    %v363 = vadd.f32 %v361, %v362
    %s364 = vtos %v363
    %v365 = vstv %s364
    %vm366 = vcmp.ge.f32.partialorder %v365, 64.0
    %v367 = vsel %vm366, %v350, %v349
    %v368 = vor.u32 %v367, 16384
    %v369 = vxor.u32 %v368, 2147483648
    %vm370 = vcmp.ge.s32.totalorder %v63, %v369
    %vm371 = vmand %vm56, %vm370
    %v372 = vsel %vm371, 1, 0
    %v373 = vcvt.s32.f32 %v372
    %374 = vadd.xlane.f32.xlu0 %v373
    %v375 = vpop.xlane.xlu0 %374
    %v376 = vrot.slane %v375, 4
    %v377 = vadd.f32 %v375, %v376
    %v378 = vrot.slane %v377, 2
    %v379 = vadd.f32 %v377, %v378
    %v380 = vrot.slane %v379, 1
    %v381 = vadd.f32 %v379, %v380
    %s382 = vtos %v381
    %v383 = vstv %s382
    %vm384 = vcmp.ge.f32.partialorder %v383, 64.0
    %v385 = vsel %vm384, %v368, %v367
    %v386 = vor.u32 %v385, 8192
    %v387 = vxor.u32 %v386, 2147483648
    %vm388 = vcmp.ge.s32.totalorder %v63, %v387
    %vm389 = vmand %vm56, %vm388
    %v390 = vsel %vm389, 1, 0
    %v391 = vcvt.s32.f32 %v390
    %392 = vadd.xlane.f32.xlu0 %v391
    %v393 = vpop.xlane.xlu0 %392
    %v394 = vrot.slane %v393, 4
    %v395 = vadd.f32 %v393, %v394
    %v396 = vrot.slane %v395, 2
    %v397 = vadd.f32 %v395, %v396
    %v398 = vrot.slane %v397, 1
    %v399 = vadd.f32 %v397, %v398
    %s400 = vtos %v399
    %v401 = vstv %s400
    %vm402 = vcmp.ge.f32.partialorder %v401, 64.0
    %v403 = vsel %vm402, %v386, %v385
    %v404 = vor.u32 %v403, 4096
    %v405 = vxor.u32 %v404, 2147483648
    %vm406 = vcmp.ge.s32.totalorder %v63, %v405
    %vm407 = vmand %vm56, %vm406
    %v408 = vsel %vm407, 1, 0
    %v409 = vcvt.s32.f32 %v408
    %410 = vadd.xlane.f32.xlu0 %v409
    %v411 = vpop.xlane.xlu0 %410
    %v412 = vrot.slane %v411, 4
    %v413 = vadd.f32 %v411, %v412
    %v414 = vrot.slane %v413, 2
    %v415 = vadd.f32 %v413, %v414
    %v416 = vrot.slane %v415, 1
    %v417 = vadd.f32 %v415, %v416
    %s418 = vtos %v417
    %v419 = vstv %s418
    %vm420 = vcmp.ge.f32.partialorder %v419, 64.0
    %v421 = vsel %vm420, %v404, %v403
    %v422 = vor.u32 %v421, 2048
    %v423 = vxor.u32 %v422, 2147483648
    %vm424 = vcmp.ge.s32.totalorder %v63, %v423
    %vm425 = vmand %vm56, %vm424
    %v426 = vsel %vm425, 1, 0
    %v427 = vcvt.s32.f32 %v426
    %428 = vadd.xlane.f32.xlu0 %v427
    %v429 = vpop.xlane.xlu0 %428
    %v430 = vrot.slane %v429, 4
    %v431 = vadd.f32 %v429, %v430
    %v432 = vrot.slane %v431, 2
    %v433 = vadd.f32 %v431, %v432
    %v434 = vrot.slane %v433, 1
    %v435 = vadd.f32 %v433, %v434
    %s436 = vtos %v435
    %v437 = vstv %s436
    %vm438 = vcmp.ge.f32.partialorder %v437, 64.0
    %v439 = vsel %vm438, %v422, %v421
    %v440 = vor.u32 %v439, 1024
    %v441 = vxor.u32 %v440, 2147483648
    %vm442 = vcmp.ge.s32.totalorder %v63, %v441
    %vm443 = vmand %vm56, %vm442
    %v444 = vsel %vm443, 1, 0
    %v445 = vcvt.s32.f32 %v444
    %446 = vadd.xlane.f32.xlu0 %v445
    %v447 = vpop.xlane.xlu0 %446
    %v448 = vrot.slane %v447, 4
    %v449 = vadd.f32 %v447, %v448
    %v450 = vrot.slane %v449, 2
    %v451 = vadd.f32 %v449, %v450
    %v452 = vrot.slane %v451, 1
    %v453 = vadd.f32 %v451, %v452
    %s454 = vtos %v453
    %v455 = vstv %s454
    %vm456 = vcmp.ge.f32.partialorder %v455, 64.0
    %v457 = vsel %vm456, %v440, %v439
    %v458 = vor.u32 %v457, 512
    %v459 = vxor.u32 %v458, 2147483648
    %vm460 = vcmp.ge.s32.totalorder %v63, %v459
    %vm461 = vmand %vm56, %vm460
    %v462 = vsel %vm461, 1, 0
    %v463 = vcvt.s32.f32 %v462
    %464 = vadd.xlane.f32.xlu0 %v463
    %v465 = vpop.xlane.xlu0 %464
    %v466 = vrot.slane %v465, 4
    %v467 = vadd.f32 %v465, %v466
    %v468 = vrot.slane %v467, 2
    %v469 = vadd.f32 %v467, %v468
    %v470 = vrot.slane %v469, 1
    %v471 = vadd.f32 %v469, %v470
    %s472 = vtos %v471
    %v473 = vstv %s472
    %vm474 = vcmp.ge.f32.partialorder %v473, 64.0
    %v475 = vsel %vm474, %v458, %v457
    %v476 = vor.u32 %v475, 256
    %v477 = vxor.u32 %v476, 2147483648
    %vm478 = vcmp.ge.s32.totalorder %v63, %v477
    %vm479 = vmand %vm56, %vm478
    %v480 = vsel %vm479, 1, 0
    %v481 = vcvt.s32.f32 %v480
    %482 = vadd.xlane.f32.xlu0 %v481
    %v483 = vpop.xlane.xlu0 %482
    %v484 = vrot.slane %v483, 4
    %v485 = vadd.f32 %v483, %v484
    %v486 = vrot.slane %v485, 2
    %v487 = vadd.f32 %v485, %v486
    %v488 = vrot.slane %v487, 1
    %v489 = vadd.f32 %v487, %v488
    %s490 = vtos %v489
    %v491 = vstv %s490
    %vm492 = vcmp.ge.f32.partialorder %v491, 64.0
    %v493 = vsel %vm492, %v476, %v475
    %v494 = vor.u32 %v493, 128
    %v495 = vxor.u32 %v494, 2147483648
    %vm496 = vcmp.ge.s32.totalorder %v63, %v495
    %vm497 = vmand %vm56, %vm496
    %v498 = vsel %vm497, 1, 0
    %v499 = vcvt.s32.f32 %v498
    %500 = vadd.xlane.f32.xlu0 %v499
    %v501 = vpop.xlane.xlu0 %500
    %v502 = vrot.slane %v501, 4
    %v503 = vadd.f32 %v501, %v502
    %v504 = vrot.slane %v503, 2
    %v505 = vadd.f32 %v503, %v504
    %v506 = vrot.slane %v505, 1
    %v507 = vadd.f32 %v505, %v506
    %s508 = vtos %v507
    %v509 = vstv %s508
    %vm510 = vcmp.ge.f32.partialorder %v509, 64.0
    %v511 = vsel %vm510, %v494, %v493
    %v512 = vor.u32 %v511, 64
    %v513 = vxor.u32 %v512, 2147483648
    %vm514 = vcmp.ge.s32.totalorder %v63, %v513
    %vm515 = vmand %vm56, %vm514
    %v516 = vsel %vm515, 1, 0
    %v517 = vcvt.s32.f32 %v516
    %518 = vadd.xlane.f32.xlu0 %v517
    %v519 = vpop.xlane.xlu0 %518
    %v520 = vrot.slane %v519, 4
    %v521 = vadd.f32 %v519, %v520
    %v522 = vrot.slane %v521, 2
    %v523 = vadd.f32 %v521, %v522
    %v524 = vrot.slane %v523, 1
    %v525 = vadd.f32 %v523, %v524
    %s526 = vtos %v525
    %v527 = vstv %s526
    %vm528 = vcmp.ge.f32.partialorder %v527, 64.0
    %v529 = vsel %vm528, %v512, %v511
    %v530 = vor.u32 %v529, 32
    %v531 = vxor.u32 %v530, 2147483648
    %vm532 = vcmp.ge.s32.totalorder %v63, %v531
    %vm533 = vmand %vm56, %vm532
    %v534 = vsel %vm533, 1, 0
    %v535 = vcvt.s32.f32 %v534
    %536 = vadd.xlane.f32.xlu0 %v535
    %v537 = vpop.xlane.xlu0 %536
    %v538 = vrot.slane %v537, 4
    %v539 = vadd.f32 %v537, %v538
    %v540 = vrot.slane %v539, 2
    %v541 = vadd.f32 %v539, %v540
    %v542 = vrot.slane %v541, 1
    %v543 = vadd.f32 %v541, %v542
    %s544 = vtos %v543
    %v545 = vstv %s544
    %vm546 = vcmp.ge.f32.partialorder %v545, 64.0
    %v547 = vsel %vm546, %v530, %v529
    %v548 = vor.u32 %v547, 16
    %v549 = vxor.u32 %v548, 2147483648
    %vm550 = vcmp.ge.s32.totalorder %v63, %v549
    %vm551 = vmand %vm56, %vm550
    %v552 = vsel %vm551, 1, 0
    %v553 = vcvt.s32.f32 %v552
    %554 = vadd.xlane.f32.xlu0 %v553
    %v555 = vpop.xlane.xlu0 %554
    %v556 = vrot.slane %v555, 4
    %v557 = vadd.f32 %v555, %v556
    %v558 = vrot.slane %v557, 2
    %v559 = vadd.f32 %v557, %v558
    %v560 = vrot.slane %v559, 1
    %v561 = vadd.f32 %v559, %v560
    %s562 = vtos %v561
    %v563 = vstv %s562
    %vm564 = vcmp.ge.f32.partialorder %v563, 64.0
    %v565 = vsel %vm564, %v548, %v547
    %v566 = vor.u32 %v565, 8
    %v567 = vxor.u32 %v566, 2147483648
    %vm568 = vcmp.ge.s32.totalorder %v63, %v567
    %vm569 = vmand %vm56, %vm568
    %v570 = vsel %vm569, 1, 0
    %v571 = vcvt.s32.f32 %v570
    %572 = vadd.xlane.f32.xlu0 %v571
    %v573 = vpop.xlane.xlu0 %572
    %v574 = vrot.slane %v573, 4
    %v575 = vadd.f32 %v573, %v574
    %v576 = vrot.slane %v575, 2
    %v577 = vadd.f32 %v575, %v576
    %v578 = vrot.slane %v577, 1
    %v579 = vadd.f32 %v577, %v578
    %s580 = vtos %v579
    %v581 = vstv %s580
    %vm582 = vcmp.ge.f32.partialorder %v581, 64.0
    %v583 = vsel %vm582, %v566, %v565
    %v584 = vor.u32 %v583, 4
    %v585 = vxor.u32 %v584, 2147483648
    %vm586 = vcmp.ge.s32.totalorder %v63, %v585
    %vm587 = vmand %vm56, %vm586
    %v588 = vsel %vm587, 1, 0
    %v589 = vcvt.s32.f32 %v588
    %590 = vadd.xlane.f32.xlu0 %v589
    %v591 = vpop.xlane.xlu0 %590
    %v592 = vrot.slane %v591, 4
    %v593 = vadd.f32 %v591, %v592
    %v594 = vrot.slane %v593, 2
    %v595 = vadd.f32 %v593, %v594
    %v596 = vrot.slane %v595, 1
    %v597 = vadd.f32 %v595, %v596
    %s598 = vtos %v597
    %v599 = vstv %s598
    %vm600 = vcmp.ge.f32.partialorder %v599, 64.0
    %v601 = vsel %vm600, %v584, %v583
    %v602 = vor.u32 %v601, 2
    %v603 = vxor.u32 %v602, 2147483648
    %vm604 = vcmp.ge.s32.totalorder %v63, %v603
    %vm605 = vmand %vm56, %vm604
    %v606 = vsel %vm605, 1, 0
    %v607 = vcvt.s32.f32 %v606
    %608 = vadd.xlane.f32.xlu0 %v607
    %v609 = vpop.xlane.xlu0 %608
    %v610 = vrot.slane %v609, 4
    %v611 = vadd.f32 %v609, %v610
    %v612 = vrot.slane %v611, 2
    %v613 = vadd.f32 %v611, %v612
    %v614 = vrot.slane %v613, 1
    %v615 = vadd.f32 %v613, %v614
    %s616 = vtos %v615
    %v617 = vstv %s616
    %vm618 = vcmp.ge.f32.partialorder %v617, 64.0
    %v619 = vsel %vm618, %v602, %v601
    %v620 = vor.u32 %v619, 1
    %v621 = vxor.u32 %v620, 2147483648
    %vm622 = vcmp.ge.s32.totalorder %v63, %v621
    %vm623 = vmand %vm56, %vm622
    %v624 = vsel %vm623, 1, 0
    %v625 = vcvt.s32.f32 %v624
    %626 = vadd.xlane.f32.xlu0 %v625
    %v627 = vpop.xlane.xlu0 %626
    %v628 = vrot.slane %v627, 4
    %v629 = vadd.f32 %v627, %v628
    %v630 = vrot.slane %v629, 2
    %v631 = vadd.f32 %v629, %v630
    %v632 = vrot.slane %v631, 1
    %v633 = vadd.f32 %v631, %v632
    %s634 = vtos %v633
    %v635 = vstv %s634
    %vm636 = vcmp.ge.f32.partialorder %v635, 64.0
    %v637 = vsel %vm636, %v620, %v619
    %v638 = vxor.u32 %v637, 2147483648
    %vm639 = vcmp.ge.s32.totalorder %v63, %v638
    %vm640 = vmand %vm56, %vm639
    %v641 = vsel %vm640, 1, 0
    %v642 = vcvt.s32.f32 %v641
    %v643 = vld [vmem:[#allocation7] sm:$0xff]
    %vm644 = vcmp.gt.f32.partialorder %v642, %v643
    %v645 = vsel %vm644, 1, 0
    %v646 = vcvt.s32.f32 %v645
    %647 = vst [vmem:[#allocation8] sm:$0xff] %v646
    // Predicated region
    $region26: #{tpu_custom_call.1} parent=1 // pred_check
      _
    $region27: #{tpu_custom_call.1} parent=1 // pred_check_branch
      %649 = sbr.rel (0) target = $region29
    $region28: #{tpu_custom_call.1} parent=1 // pred_region
      %s651 = ssub.s32 128, 128
      %652 = vsyncadd [#allocation4], %s651
      %s654 = sshll.u32 [#allocation8], 4
      %s655 = int_to_ptr.vmem [resolvable:$true] %s654
      %657 = dma.vmem_to_hbm [thread:$0]  %s655, 128, %s3, [#allocation4]
    $region29: #{tpu_custom_call.1} parent=1 // pred_fallthru
      _
    // Predicated region
    $region30: #{tpu_custom_call.1} parent=1 // pred_check
      _
    $region31: #{tpu_custom_call.1} parent=1 // pred_check_branch
      %659 = sbr.rel (0) target = $region33
    $region32: #{tpu_custom_call.1} parent=1 // pred_region
      %660 = dma.done [#allocation4], 128
    $region33: #{tpu_custom_call.1} parent=1 // pred_fallthru
      _
    %661 = vsyncpa [#allocation3], 1
    %662 = vsyncpa [#allocation6], 1
    %663 = vsyncpa [#allocation4], 1

</llo_original>
